<compile_context>
chip_gen: v6e
topology: v6e:2x2x1
jax: 0.10.0
libtpu: 0.0.40
codegen_flags: <defaults>
</compile_context>

<pallas_src>
import jax
import jax.numpy as jnp
from jax import lax
from jax.experimental import pallas as pl
from jax.experimental.pallas import tpu as pltpu
import numpy as np

# ----------------------------- configuration -----------------------------
B = 2          # batch
N = 16         # sequence length (tokens)
DIM = 64       # embedding dim
NUM_HEADS = 4  # heads
HEAD_DIM = DIM // NUM_HEADS
MLP_RATIO = 4.0
MLP_HIDDEN = int(DIM * MLP_RATIO)
EPS = 1e-6
SCALE = HEAD_DIM ** (-0.5)
BN = B * N                 # batch folded into rows inside the kernel
PACKED = NUM_HEADS * BN    # packed score width (head h lives in lanes [BN*h, BN*(h+1)))
NEG_BIG = -1e30


# --------------------------- in-kernel helpers ----------------------------
def _layer_norm_fast(x, gamma, beta, eps=EPS):
    # Independent reductions (sum, sum of squares) so the two cross-lane
    # reduces can overlap on the XLUs; var = E[x^2] - mean^2.
    inv_d = 1.0 / x.shape[-1]
    s1 = jnp.sum(x, axis=-1, keepdims=True)
    s2 = jnp.sum(x * x, axis=-1, keepdims=True)
    mu = s1 * inv_d
    var = s2 * inv_d - mu * mu
    return (x - mu) * lax.rsqrt(var + eps) * gamma + beta


def _erf_poly(x):
    # Abramowitz & Stegun 7.1.26, |error| <= 1.5e-7 (f32-level).  Uses only
    # exp / abs / where / polynomial ops, all guaranteed to lower in Mosaic.
    a1, a2, a3, a4, a5 = 0.254829592, -0.284496736, 1.421413741, -1.453152027, 1.061405429
    p = 0.3275911
    ax = jnp.abs(x)
    t = 1.0 / (1.0 + p * ax)
    poly = ((((a5 * t + a4) * t + a3) * t + a2) * t + a1) * t
    y = 1.0 - poly * jnp.exp(-ax * ax)
    return jnp.where(x >= 0, y, -y)


def _gelu_exact(x):
    # torch.nn.GELU() default (exact erf) semantics.
    return 0.5 * x * (1.0 + _erf_poly(x * np.float32(1.0 / np.sqrt(2.0))))


# ------------------------------- kernel ----------------------------------
def block_kernel(x_ref, wq_ref, wk_ref, wv_ref, wproj_ref, bproj_ref,
                 g1_ref, be1_ref, w1_ref, bm1_ref, w2_ref, bm2_ref,
                 g2_ref, be2_ref, hm_ref, amask_ref, o_ref):
    x = x_ref[...]                                        # (BN, DIM), batch folded

    # ---- Attention (qkv_bias=False, proj has bias) ----
    q = jnp.dot(x, wq_ref[...], preferred_element_type=jnp.float32)   # (BN, DIM)
    k = jnp.dot(x, wk_ref[...], preferred_element_type=jnp.float32)
    v = jnp.dot(x, wv_ref[...], preferred_element_type=jnp.float32)

    hm = hm_ref[...]                                      # (PACKED, DIM) 0/1 head selector
    # Replicate k / v along sublanes (NUM_HEADS copies) and mask each copy to
    # its head's channel range -> packed (PACKED, DIM) operands.
    k_big = jnp.concatenate([k] * NUM_HEADS, axis=0) * hm
    v_big = jnp.concatenate([v] * NUM_HEADS, axis=0) * hm

    # Packed scores: lanes [BN*h, BN*(h+1)) hold head h's (BN x BN) scores.
    # dot_general contracts the matching minor dims (no explicit k transpose).
    dn_qk = (((1,), (1,)), ((), ()))
    s = lax.dot_general(q, k_big, dn_qk,
                        preferred_element_type=jnp.float32) * SCALE    # (BN, PACKED)
    s = s + amask_ref[...]                                # same-image mask: 0 / -1e30

    # Softmax is shift-invariant per head as long as numerator and denominator
    # share the subtracted constant, so ONE global row max suffices (single
    # XLU reduce on the full 128-lane tile; no segmented reduces).
    s = s - jnp.max(s, axis=-1, keepdims=True)
    p = jnp.exp(s)                                        # one full-width exp (EUP)

    # Per-head numerator and denominator as MXU matmuls against resident
    # constants (masked lanes contribute exactly 0):
    num = jnp.dot(p, v_big, preferred_element_type=jnp.float32)   # (BN, DIM) concat'd head outs
    den = jnp.dot(p, hm, preferred_element_type=jnp.float32)      # (BN, DIM) per-head sums, broadcast to head channels
    attn = num / den                                      # exact divide (not EUP-bound)

    attn = (jnp.dot(attn, wproj_ref[...],
                    preferred_element_type=jnp.float32) + bproj_ref[...])

    # ---- residual + LayerNorm 1 (post-norm) ----
    x1 = _layer_norm_fast(x + attn, g1_ref[...], be1_ref[...])

    # ---- MLP: Linear -> GELU(exact erf) -> Linear ----
    hid = jnp.dot(x1, w1_ref[...], preferred_element_type=jnp.float32) + bm1_ref[...]
    hid = _gelu_exact(hid)
    y = jnp.dot(hid, w2_ref[...], preferred_element_type=jnp.float32) + bm2_ref[...]

    # ---- residual + LayerNorm 2 (post-norm) ----
    x2 = _layer_norm_fast(x1 + y, g2_ref[...], be2_ref[...])

    o_ref[...] = x2.astype(o_ref.dtype)
    # TODO(synk): with larger BN / fused layers, cast matmul operands to bf16
    # (keep f32 accumulation + f32 elementwise) for v6e/v7x MXU throughput.


# ------------------------------ wrapper -----------------------------------
def prepare_kernel_params(params):
    """One-time host-side plumbing: split fused QKV weight, build static masks."""
    (wqkv, wproj, bproj, g1, be1, w1, bm1, w2, bm2, g2, be2) = params
    wq = wqkv[:, 0 * DIM:1 * DIM]
    wk = wqkv[:, 1 * DIM:2 * DIM]
    wv = wqkv[:, 2 * DIM:3 * DIM]

    # (PACKED, DIM) head selector: row h*BN+j is 1 on head h's channel range.
    hm = (np.arange(PACKED)[:, None] // BN ==
          np.arange(DIM)[None, :] // HEAD_DIM).astype(np.float32)
    # (BN, PACKED) additive mask: token i only attends tokens of its own image
    # (block-diagonal over batch), tiled across the NUM_HEADS packed blocks.
    same = (np.arange(BN)[:, None] // N == np.arange(BN)[None, :] // N)
    amask = np.where(np.tile(same, (1, NUM_HEADS)), 0.0, NEG_BIG).astype(np.float32)

    return (wq, wk, wv, wproj, bproj, g1, be1, w1, bm1, w2, bm2, g2, be2,
            jnp.asarray(hm), jnp.asarray(amask))


@jax.jit
def block_forward(x, kparams):
    assert x.shape == (B, N, DIM)
    x2d = x.reshape(BN, DIM)   # fold batch into rows (fused into the jit'd dispatch)

    def full(a):
        nd = a.ndim
        return pl.BlockSpec(a.shape, lambda i, nd=nd: (0,) * nd)

    in_specs = [pl.BlockSpec((BN, DIM), lambda i: (0, 0))] + [full(a) for a in kparams]

    out2d = pl.pallas_call(
        block_kernel,
        out_shape=jax.ShapeDtypeStruct((BN, DIM), x.dtype),
        grid_spec=pltpu.PrefetchScalarGridSpec(
            num_scalar_prefetch=0,
            grid=(1,),   # whole problem in one step (<0.5 MiB working set)
            in_specs=in_specs,
            out_specs=pl.BlockSpec((BN, DIM), lambda i: (0, 0)),
        ),
        compiler_params=pltpu.CompilerParams(
            dimension_semantics=("arbitrary",)),
        # TODO(synk): amortize launch overhead further by looping over multiple
        # transformer layers inside this kernel (weights stay VMEM-resident),
        # then split rows on image boundaries across v7x's 2 TensorCores.
    )(x2d, *kparams)

    return out2d.reshape(B, N, DIM)


# --------------------------- pure-JAX reference ----------------------------
def _layer_norm_ref(x, gamma, beta, eps=EPS):
    mu = jnp.mean(x, axis=-1, keepdims=True)
    var = jnp.mean((x - mu) ** 2, axis=-1, keepdims=True)
    return (x - mu) * lax.rsqrt(var + eps) * gamma + beta


def block_reference(x, params):
    (wqkv, wproj, bproj, g1, be1, w1, bm1, w2, bm2, g2, be2) = params
    Bq, Nq, D = x.shape
    qkv = x @ wqkv                                                  # (B, N, 3D)
    qkv = qkv.reshape(Bq, Nq, 3, NUM_HEADS, HEAD_DIM)
    qkv = jnp.transpose(qkv, (2, 0, 3, 1, 4))                       # (3, B, H, N, hd)
    q, k, v = qkv[0], qkv[1], qkv[2]
    attn = jnp.einsum('bhnd,bhmd->bhnm', q, k) * SCALE
    attn = jax.nn.softmax(attn, axis=-1)
    o = jnp.einsum('bhnm,bhmd->bhnd', attn, v)
    o = jnp.transpose(o, (0, 2, 1, 3)).reshape(Bq, Nq, D)
    o = o @ wproj + bproj
    x1 = _layer_norm_ref(x + o, g1, be1)
    h = jax.nn.gelu(x1 @ w1 + bm1, approximate=False)
    y = h @ w2 + bm2
    return _layer_norm_ref(x1 + y, g2, be2)


# ------------------------------- main --------------------------------------
if __name__ == "__main__":
    key = jax.random.PRNGKey(0)
    keys = jax.random.split(key, 8)

    x = jax.random.normal(keys[0], (B, N, DIM), dtype=jnp.float32)

    # Deterministic synthetic parameters (weights stored as (in, out), i.e. W.T
    # of the PyTorch nn.Linear weight, so the kernel does x @ W directly).
    wqkv = jax.random.normal(keys[1], (DIM, 3 * DIM), jnp.float32) * 0.05
    wproj = jax.random.normal(keys[2], (DIM, DIM), jnp.float32) * 0.05
    bproj = jax.random.normal(keys[3], (1, DIM), jnp.float32) * 0.02
    w1 = jax.random.normal(keys[4], (DIM, MLP_HIDDEN), jnp.float32) * 0.05
    bm1 = jax.random.normal(keys[5], (1, MLP_HIDDEN), jnp.float32) * 0.02
    w2 = jax.random.normal(keys[6], (MLP_HIDDEN, DIM), jnp.float32) * 0.05
    bm2 = jax.random.normal(keys[7], (1, DIM), jnp.float32) * 0.02
    # LayerNorm affine params (torch default init: ones / zeros)
    g1 = jnp.ones((1, DIM), jnp.float32)
    be1 = jnp.zeros((1, DIM), jnp.float32)
    g2 = jnp.ones((1, DIM), jnp.float32)
    be2 = jnp.zeros((1, DIM), jnp.float32)

    params = (wqkv, wproj, bproj, g1, be1, w1, bm1, w2, bm2, g2, be2)
    kparams = prepare_kernel_params(params)   # one-time: weight split + static masks

    out = block_forward(x, kparams)
    out = jax.block_until_ready(out)

    ref = jax.block_until_ready(block_reference(x, params))
    np.testing.assert_allclose(np.asarray(out), np.asarray(ref),
                               rtol=1e-3, atol=1e-3)

    print("KERNEL_OK")
</pallas_src>

<mosaic_0001>
module attributes {stable_mosaic.version = 11 : i64} {
  func.func @block_kernel(%arg0: i32, %arg1: memref<32x64xf32, #tpu.memory_space<vmem>>, %arg2: memref<64x64xf32, #tpu.memory_space<vmem>>, %arg3: memref<64x64xf32, #tpu.memory_space<vmem>>, %arg4: memref<64x64xf32, #tpu.memory_space<vmem>>, %arg5: memref<64x64xf32, #tpu.memory_space<vmem>>, %arg6: memref<1x64xf32, #tpu.memory_space<vmem>>, %arg7: memref<1x64xf32, #tpu.memory_space<vmem>>, %arg8: memref<1x64xf32, #tpu.memory_space<vmem>>, %arg9: memref<64x256xf32, #tpu.memory_space<vmem>>, %arg10: memref<1x256xf32, #tpu.memory_space<vmem>>, %arg11: memref<256x64xf32, #tpu.memory_space<vmem>>, %arg12: memref<1x64xf32, #tpu.memory_space<vmem>>, %arg13: memref<1x64xf32, #tpu.memory_space<vmem>>, %arg14: memref<1x64xf32, #tpu.memory_space<vmem>>, %arg15: memref<128x64xf32, #tpu.memory_space<vmem>>, %arg16: memref<32x128xf32, #tpu.memory_space<vmem>>, %arg17: memref<32x64xf32, #tpu.memory_space<vmem>>) attributes {dimension_semantics = [#tpu.dimension_semantics<arbitrary>], iteration_bounds = array<i64: 1>, scalar_prefetch = 0 : i64, scratch_operands = 0 : i64, tpu.core_type = #tpu.core_type<tc>, window_params = [{pipeline_mode = #tpu.pipeline_mode<synchronous>, transform_indices = @transform_0, window_bounds = array<i64: 32, 64>}, {pipeline_mode = #tpu.pipeline_mode<synchronous>, transform_indices = @transform_1, window_bounds = array<i64: 64, 64>}, {pipeline_mode = #tpu.pipeline_mode<synchronous>, transform_indices = @transform_2, window_bounds = array<i64: 64, 64>}, {pipeline_mode = #tpu.pipeline_mode<synchronous>, transform_indices = @transform_3, window_bounds = array<i64: 64, 64>}, {pipeline_mode = #tpu.pipeline_mode<synchronous>, transform_indices = @transform_4, window_bounds = array<i64: 64, 64>}, {pipeline_mode = #tpu.pipeline_mode<synchronous>, transform_indices = @transform_5, window_bounds = array<i64: 1, 64>}, {pipeline_mode = #tpu.pipeline_mode<synchronous>, transform_indices = @transform_6, window_bounds = array<i64: 1, 64>}, {pipeline_mode = #tpu.pipeline_mode<synchronous>, transform_indices = @transform_7, window_bounds = array<i64: 1, 64>}, {pipeline_mode = #tpu.pipeline_mode<synchronous>, transform_indices = @transform_8, window_bounds = array<i64: 64, 256>}, {pipeline_mode = #tpu.pipeline_mode<synchronous>, transform_indices = @transform_9, window_bounds = array<i64: 1, 256>}, {pipeline_mode = #tpu.pipeline_mode<synchronous>, transform_indices = @transform_10, window_bounds = array<i64: 256, 64>}, {pipeline_mode = #tpu.pipeline_mode<synchronous>, transform_indices = @transform_11, window_bounds = array<i64: 1, 64>}, {pipeline_mode = #tpu.pipeline_mode<synchronous>, transform_indices = @transform_12, window_bounds = array<i64: 1, 64>}, {pipeline_mode = #tpu.pipeline_mode<synchronous>, transform_indices = @transform_13, window_bounds = array<i64: 1, 64>}, {pipeline_mode = #tpu.pipeline_mode<synchronous>, transform_indices = @transform_14, window_bounds = array<i64: 128, 64>}, {pipeline_mode = #tpu.pipeline_mode<synchronous>, transform_indices = @transform_15, window_bounds = array<i64: 32, 128>}, {pipeline_mode = #tpu.pipeline_mode<synchronous>, transform_indices = @transform_16, window_bounds = array<i64: 32, 64>}]} {
    %c0 = arith.constant 0 : index
    %c0_0 = arith.constant 0 : index
    %0 = vector.load %arg1[%c0, %c0_0] : memref<32x64xf32, #tpu.memory_space<vmem>>, vector<32x64xf32>
    %c0_1 = arith.constant 0 : index
    %c0_2 = arith.constant 0 : index
    %1 = vector.load %arg2[%c0_1, %c0_2] : memref<64x64xf32, #tpu.memory_space<vmem>>, vector<64x64xf32>
    %cst = arith.constant dense<0.000000e+00> : vector<32x64xf32>
    %2 = tpu.matmul %0, %1, %cst {dimension_numbers = #tpu.dot_dimension_numbers<[1], [0], [0], [1], [0, 0, 1, 1], [], []>} : vector<32x64xf32>, vector<64x64xf32>, vector<32x64xf32> -> vector<32x64xf32>
    %c0_3 = arith.constant 0 : index
    %c0_4 = arith.constant 0 : index
    %3 = vector.load %arg3[%c0_3, %c0_4] : memref<64x64xf32, #tpu.memory_space<vmem>>, vector<64x64xf32>
    %cst_5 = arith.constant dense<0.000000e+00> : vector<32x64xf32>
    %4 = tpu.matmul %0, %3, %cst_5 {dimension_numbers = #tpu.dot_dimension_numbers<[1], [0], [0], [1], [0, 0, 1, 1], [], []>} : vector<32x64xf32>, vector<64x64xf32>, vector<32x64xf32> -> vector<32x64xf32>
    %c0_6 = arith.constant 0 : index
    %c0_7 = arith.constant 0 : index
    %5 = vector.load %arg4[%c0_6, %c0_7] : memref<64x64xf32, #tpu.memory_space<vmem>>, vector<64x64xf32>
    %cst_8 = arith.constant dense<0.000000e+00> : vector<32x64xf32>
    %6 = tpu.matmul %0, %5, %cst_8 {dimension_numbers = #tpu.dot_dimension_numbers<[1], [0], [0], [1], [0, 0, 1, 1], [], []>} : vector<32x64xf32>, vector<64x64xf32>, vector<32x64xf32> -> vector<32x64xf32>
    %c0_9 = arith.constant 0 : index
    %c0_10 = arith.constant 0 : index
    %7 = vector.load %arg15[%c0_9, %c0_10] : memref<128x64xf32, #tpu.memory_space<vmem>>, vector<128x64xf32>
    %8 = tpu.concatenate %4, %4, %4, %4 in 0 : vector<32x64xf32>, vector<32x64xf32>, vector<32x64xf32>, vector<32x64xf32> -> vector<128x64xf32>
    %9 = arith.mulf %8, %7 : vector<128x64xf32>
    %10 = tpu.concatenate %6, %6, %6, %6 in 0 : vector<32x64xf32>, vector<32x64xf32>, vector<32x64xf32>, vector<32x64xf32> -> vector<128x64xf32>
    %11 = arith.mulf %10, %7 : vector<128x64xf32>
    %cst_11 = arith.constant dense<0.000000e+00> : vector<32x128xf32>
    %12 = tpu.matmul %2, %9, %cst_11 {dimension_numbers = #tpu.dot_dimension_numbers<[1], [1], [0], [0], [0, 0, 1, 0], [], []>} : vector<32x64xf32>, vector<128x64xf32>, vector<32x128xf32> -> vector<32x128xf32>
    %cst_12 = arith.constant 2.500000e-01 : f32
    %13 = vector.broadcast %cst_12 : f32 to vector<32x128xf32>
    %14 = arith.mulf %12, %13 : vector<32x128xf32>
    %c0_13 = arith.constant 0 : index
    %c0_14 = arith.constant 0 : index
    %15 = vector.load %arg16[%c0_13, %c0_14] : memref<32x128xf32, #tpu.memory_space<vmem>>, vector<32x128xf32>
    %16 = arith.addf %14, %15 : vector<32x128xf32>
    %cst_15 = arith.constant dense<0xFF800000> : vector<32xf32>
    %17 = vector.multi_reduction <maximumf>, %16, %cst_15 [1] : vector<32x128xf32> to vector<32xf32>
    %18 = vector.shape_cast %17 : vector<32xf32> to vector<32x1xf32>
    %19 = vector.broadcast %18 : vector<32x1xf32> to vector<32x128xf32>
    %20 = arith.subf %16, %19 : vector<32x128xf32>
    %21 = math.exp %20 : vector<32x128xf32>
    %cst_16 = arith.constant dense<0.000000e+00> : vector<32x64xf32>
    %22 = tpu.matmul %21, %11, %cst_16 {dimension_numbers = #tpu.dot_dimension_numbers<[1], [0], [0], [1], [0, 0, 1, 1], [], []>} : vector<32x128xf32>, vector<128x64xf32>, vector<32x64xf32> -> vector<32x64xf32>
    %cst_17 = arith.constant dense<0.000000e+00> : vector<32x64xf32>
    %23 = tpu.matmul %21, %7, %cst_17 {dimension_numbers = #tpu.dot_dimension_numbers<[1], [0], [0], [1], [0, 0, 1, 1], [], []>} : vector<32x128xf32>, vector<128x64xf32>, vector<32x64xf32> -> vector<32x64xf32>
    %24 = arith.divf %22, %23 : vector<32x64xf32>
    %c0_18 = arith.constant 0 : index
    %c0_19 = arith.constant 0 : index
    %25 = vector.load %arg5[%c0_18, %c0_19] : memref<64x64xf32, #tpu.memory_space<vmem>>, vector<64x64xf32>
    %cst_20 = arith.constant dense<0.000000e+00> : vector<32x64xf32>
    %26 = tpu.matmul %24, %25, %cst_20 {dimension_numbers = #tpu.dot_dimension_numbers<[1], [0], [0], [1], [0, 0, 1, 1], [], []>} : vector<32x64xf32>, vector<64x64xf32>, vector<32x64xf32> -> vector<32x64xf32>
    %c0_21 = arith.constant 0 : index
    %c0_22 = arith.constant 0 : index
    %27 = vector.load %arg6[%c0_21, %c0_22] : memref<1x64xf32, #tpu.memory_space<vmem>>, vector<1x64xf32>
    %28 = vector.broadcast %27 : vector<1x64xf32> to vector<32x64xf32>
    %29 = arith.addf %26, %28 : vector<32x64xf32>
    %30 = arith.addf %0, %29 : vector<32x64xf32>
    %c0_23 = arith.constant 0 : index
    %c0_24 = arith.constant 0 : index
    %31 = vector.load %arg7[%c0_23, %c0_24] : memref<1x64xf32, #tpu.memory_space<vmem>>, vector<1x64xf32>
    %c0_25 = arith.constant 0 : index
    %c0_26 = arith.constant 0 : index
    %32 = vector.load %arg8[%c0_25, %c0_26] : memref<1x64xf32, #tpu.memory_space<vmem>>, vector<1x64xf32>
    %cst_27 = arith.constant dense<0.000000e+00> : vector<32xf32>
    %33 = vector.multi_reduction <add>, %30, %cst_27 [1] : vector<32x64xf32> to vector<32xf32>
    %34 = vector.shape_cast %33 : vector<32xf32> to vector<32x1xf32>
    %35 = arith.mulf %30, %30 : vector<32x64xf32>
    %cst_28 = arith.constant dense<0.000000e+00> : vector<32xf32>
    %36 = vector.multi_reduction <add>, %35, %cst_28 [1] : vector<32x64xf32> to vector<32xf32>
    %37 = vector.shape_cast %36 : vector<32xf32> to vector<32x1xf32>
    %cst_29 = arith.constant 1.562500e-02 : f32
    %38 = vector.broadcast %cst_29 : f32 to vector<32x1xf32>
    %39 = arith.mulf %34, %38 : vector<32x1xf32>
    %cst_30 = arith.constant 1.562500e-02 : f32
    %40 = vector.broadcast %cst_30 : f32 to vector<32x1xf32>
    %41 = arith.mulf %37, %40 : vector<32x1xf32>
    %42 = arith.mulf %39, %39 : vector<32x1xf32>
    %43 = arith.subf %41, %42 : vector<32x1xf32>
    %44 = vector.broadcast %39 : vector<32x1xf32> to vector<32x64xf32>
    %45 = arith.subf %30, %44 : vector<32x64xf32>
    %cst_31 = arith.constant 9.99999997E-7 : f32
    %46 = vector.broadcast %cst_31 : f32 to vector<32x1xf32>
    %47 = arith.addf %43, %46 : vector<32x1xf32>
    %48 = math.rsqrt %47 : vector<32x1xf32>
    %49 = vector.broadcast %48 : vector<32x1xf32> to vector<32x64xf32>
    %50 = arith.mulf %45, %49 : vector<32x64xf32>
    %51 = vector.broadcast %31 : vector<1x64xf32> to vector<32x64xf32>
    %52 = arith.mulf %50, %51 : vector<32x64xf32>
    %53 = vector.broadcast %32 : vector<1x64xf32> to vector<32x64xf32>
    %54 = arith.addf %52, %53 : vector<32x64xf32>
    %c0_32 = arith.constant 0 : index
    %c0_33 = arith.constant 0 : index
    %55 = vector.load %arg9[%c0_32, %c0_33] : memref<64x256xf32, #tpu.memory_space<vmem>>, vector<64x256xf32>
    %cst_34 = arith.constant dense<0.000000e+00> : vector<32x256xf32>
    %56 = tpu.matmul %54, %55, %cst_34 {dimension_numbers = #tpu.dot_dimension_numbers<[1], [0], [0], [1], [0, 0, 1, 1], [], []>} : vector<32x64xf32>, vector<64x256xf32>, vector<32x256xf32> -> vector<32x256xf32>
    %c0_35 = arith.constant 0 : index
    %c0_36 = arith.constant 0 : index
    %57 = vector.load %arg10[%c0_35, %c0_36] : memref<1x256xf32, #tpu.memory_space<vmem>>, vector<1x256xf32>
    %58 = vector.broadcast %57 : vector<1x256xf32> to vector<32x256xf32>
    %59 = arith.addf %56, %58 : vector<32x256xf32>
    %cst_37 = arith.constant 5.000000e-01 : f32
    %60 = vector.broadcast %cst_37 : f32 to vector<32x256xf32>
    %61 = arith.mulf %60, %59 : vector<32x256xf32>
    %cst_38 = arith.constant 0.707106769 : f32
    %62 = vector.broadcast %cst_38 : f32 to vector<32x256xf32>
    %63 = arith.mulf %59, %62 : vector<32x256xf32>
    %64 = math.absf %63 : vector<32x256xf32>
    %cst_39 = arith.constant 0.327591091 : f32
    %65 = vector.broadcast %cst_39 : f32 to vector<32x256xf32>
    %66 = arith.mulf %65, %64 : vector<32x256xf32>
    %cst_40 = arith.constant 1.000000e+00 : f32
    %67 = vector.broadcast %cst_40 : f32 to vector<32x256xf32>
    %68 = arith.addf %67, %66 : vector<32x256xf32>
    %cst_41 = arith.constant 1.000000e+00 : f32
    %69 = vector.broadcast %cst_41 : f32 to vector<32x256xf32>
    %70 = arith.divf %69, %68 : vector<32x256xf32>
    %cst_42 = arith.constant 1.06140542 : f32
    %71 = vector.broadcast %cst_42 : f32 to vector<32x256xf32>
    %72 = arith.mulf %71, %70 : vector<32x256xf32>
    %cst_43 = arith.constant -1.45315206 : f32
    %73 = vector.broadcast %cst_43 : f32 to vector<32x256xf32>
    %74 = arith.addf %72, %73 : vector<32x256xf32>
    %75 = arith.mulf %74, %70 : vector<32x256xf32>
    %cst_44 = arith.constant 1.42141378 : f32
    %76 = vector.broadcast %cst_44 : f32 to vector<32x256xf32>
    %77 = arith.addf %75, %76 : vector<32x256xf32>
    %78 = arith.mulf %77, %70 : vector<32x256xf32>
    %cst_45 = arith.constant -0.284496725 : f32
    %79 = vector.broadcast %cst_45 : f32 to vector<32x256xf32>
    %80 = arith.addf %78, %79 : vector<32x256xf32>
    %81 = arith.mulf %80, %70 : vector<32x256xf32>
    %cst_46 = arith.constant 0.254829586 : f32
    %82 = vector.broadcast %cst_46 : f32 to vector<32x256xf32>
    %83 = arith.addf %81, %82 : vector<32x256xf32>
    %84 = arith.mulf %83, %70 : vector<32x256xf32>
    %cst_47 = arith.constant 0.000000e+00 : f32
    %85 = vector.broadcast %cst_47 : f32 to vector<32x256xf32>
    %86 = arith.subf %85, %64 : vector<32x256xf32>
    %87 = arith.mulf %86, %64 : vector<32x256xf32>
    %88 = math.exp %87 : vector<32x256xf32>
    %89 = arith.mulf %84, %88 : vector<32x256xf32>
    %cst_48 = arith.constant 1.000000e+00 : f32
    %90 = vector.broadcast %cst_48 : f32 to vector<32x256xf32>
    %91 = arith.subf %90, %89 : vector<32x256xf32>
    %cst_49 = arith.constant 0.000000e+00 : f32
    %92 = vector.broadcast %cst_49 : f32 to vector<32x256xf32>
    %93 = arith.cmpf oge, %63, %92 : vector<32x256xf32>
    %cst_50 = arith.constant 0.000000e+00 : f32
    %94 = vector.broadcast %cst_50 : f32 to vector<32x256xf32>
    %95 = arith.subf %94, %91 : vector<32x256xf32>
    %96 = arith.select %93, %91, %95 : vector<32x256xi1>, vector<32x256xf32>
    %cst_51 = arith.constant 1.000000e+00 : f32
    %97 = vector.broadcast %cst_51 : f32 to vector<32x256xf32>
    %98 = arith.addf %97, %96 : vector<32x256xf32>
    %99 = arith.mulf %61, %98 : vector<32x256xf32>
    %c0_52 = arith.constant 0 : index
    %c0_53 = arith.constant 0 : index
    %100 = vector.load %arg11[%c0_52, %c0_53] : memref<256x64xf32, #tpu.memory_space<vmem>>, vector<256x64xf32>
    %cst_54 = arith.constant dense<0.000000e+00> : vector<32x64xf32>
    %101 = tpu.matmul %99, %100, %cst_54 {dimension_numbers = #tpu.dot_dimension_numbers<[1], [0], [0], [1], [0, 0, 1, 1], [], []>} : vector<32x256xf32>, vector<256x64xf32>, vector<32x64xf32> -> vector<32x64xf32>
    %c0_55 = arith.constant 0 : index
    %c0_56 = arith.constant 0 : index
    %102 = vector.load %arg12[%c0_55, %c0_56] : memref<1x64xf32, #tpu.memory_space<vmem>>, vector<1x64xf32>
    %103 = vector.broadcast %102 : vector<1x64xf32> to vector<32x64xf32>
    %104 = arith.addf %101, %103 : vector<32x64xf32>
    %105 = arith.addf %54, %104 : vector<32x64xf32>
    %c0_57 = arith.constant 0 : index
    %c0_58 = arith.constant 0 : index
    %106 = vector.load %arg13[%c0_57, %c0_58] : memref<1x64xf32, #tpu.memory_space<vmem>>, vector<1x64xf32>
    %c0_59 = arith.constant 0 : index
    %c0_60 = arith.constant 0 : index
    %107 = vector.load %arg14[%c0_59, %c0_60] : memref<1x64xf32, #tpu.memory_space<vmem>>, vector<1x64xf32>
    %cst_61 = arith.constant dense<0.000000e+00> : vector<32xf32>
    %108 = vector.multi_reduction <add>, %105, %cst_61 [1] : vector<32x64xf32> to vector<32xf32>
    %109 = vector.shape_cast %108 : vector<32xf32> to vector<32x1xf32>
    %110 = arith.mulf %105, %105 : vector<32x64xf32>
    %cst_62 = arith.constant dense<0.000000e+00> : vector<32xf32>
    %111 = vector.multi_reduction <add>, %110, %cst_62 [1] : vector<32x64xf32> to vector<32xf32>
    %112 = vector.shape_cast %111 : vector<32xf32> to vector<32x1xf32>
    %cst_63 = arith.constant 1.562500e-02 : f32
    %113 = vector.broadcast %cst_63 : f32 to vector<32x1xf32>
    %114 = arith.mulf %109, %113 : vector<32x1xf32>
    %cst_64 = arith.constant 1.562500e-02 : f32
    %115 = vector.broadcast %cst_64 : f32 to vector<32x1xf32>
    %116 = arith.mulf %112, %115 : vector<32x1xf32>
    %117 = arith.mulf %114, %114 : vector<32x1xf32>
    %118 = arith.subf %116, %117 : vector<32x1xf32>
    %119 = vector.broadcast %114 : vector<32x1xf32> to vector<32x64xf32>
    %120 = arith.subf %105, %119 : vector<32x64xf32>
    %cst_65 = arith.constant 9.99999997E-7 : f32
    %121 = vector.broadcast %cst_65 : f32 to vector<32x1xf32>
    %122 = arith.addf %118, %121 : vector<32x1xf32>
    %123 = math.rsqrt %122 : vector<32x1xf32>
    %124 = vector.broadcast %123 : vector<32x1xf32> to vector<32x64xf32>
    %125 = arith.mulf %120, %124 : vector<32x64xf32>
    %126 = vector.broadcast %106 : vector<1x64xf32> to vector<32x64xf32>
    %127 = arith.mulf %125, %126 : vector<32x64xf32>
    %128 = vector.broadcast %107 : vector<1x64xf32> to vector<32x64xf32>
    %129 = arith.addf %127, %128 : vector<32x64xf32>
    %c0_66 = arith.constant 0 : index
    %c0_67 = arith.constant 0 : index
    %130 = vector.load %arg17[%c0_66, %c0_67] : memref<32x64xf32, #tpu.memory_space<vmem>>, vector<32x64xf32>
    tpu.vector_store %arg17[%c0_66, %c0_67], %129 {strides = array<i32>} : memref<32x64xf32, #tpu.memory_space<vmem>>, vector<32x64xf32>,
    return
  }
  func.func @transform_0(%arg0: i32) -> (i32, i32) {
    %c0_i32 = arith.constant 0 : i32
    %c0_i32_0 = arith.constant 0 : i32
    %c0_i32_1 = arith.constant 0 : i32
    return %c0_i32, %c0_i32_0 : i32, i32
  }
  func.func @transform_1(%arg0: i32) -> (i32, i32) {
    %c0_i32 = arith.constant 0 : i32
    %c0_i32_0 = arith.constant 0 : i32
    %c0_i32_1 = arith.constant 0 : i32
    return %c0_i32, %c0_i32_0 : i32, i32
  }
  func.func @transform_2(%arg0: i32) -> (i32, i32) {
    %c0_i32 = arith.constant 0 : i32
    %c0_i32_0 = arith.constant 0 : i32
    %c0_i32_1 = arith.constant 0 : i32
    return %c0_i32, %c0_i32_0 : i32, i32
  }
  func.func @transform_3(%arg0: i32) -> (i32, i32) {
    %c0_i32 = arith.constant 0 : i32
    %c0_i32_0 = arith.constant 0 : i32
    %c0_i32_1 = arith.constant 0 : i32
    return %c0_i32, %c0_i32_0 : i32, i32
  }
  func.func @transform_4(%arg0: i32) -> (i32, i32) {
    %c0_i32 = arith.constant 0 : i32
    %c0_i32_0 = arith.constant 0 : i32
    %c0_i32_1 = arith.constant 0 : i32
    return %c0_i32, %c0_i32_0 : i32, i32
  }
  func.func @transform_5(%arg0: i32) -> (i32, i32) {
    %c0_i32 = arith.constant 0 : i32
    %c0_i32_0 = arith.constant 0 : i32
    %c0_i32_1 = arith.constant 0 : i32
    return %c0_i32, %c0_i32_0 : i32, i32
  }
  func.func @transform_6(%arg0: i32) -> (i32, i32) {
    %c0_i32 = arith.constant 0 : i32
    %c0_i32_0 = arith.constant 0 : i32
    %c0_i32_1 = arith.constant 0 : i32
    return %c0_i32, %c0_i32_0 : i32, i32
  }
  func.func @transform_7(%arg0: i32) -> (i32, i32) {
    %c0_i32 = arith.constant 0 : i32
    %c0_i32_0 = arith.constant 0 : i32
    %c0_i32_1 = arith.constant 0 : i32
    return %c0_i32, %c0_i32_0 : i32, i32
  }
  func.func @transform_8(%arg0: i32) -> (i32, i32) {
    %c0_i32 = arith.constant 0 : i32
    %c0_i32_0 = arith.constant 0 : i32
    %c0_i32_1 = arith.constant 0 : i32
    return %c0_i32, %c0_i32_0 : i32, i32
  }
  func.func @transform_9(%arg0: i32) -> (i32, i32) {
    %c0_i32 = arith.constant 0 : i32
    %c0_i32_0 = arith.constant 0 : i32
    %c0_i32_1 = arith.constant 0 : i32
    return %c0_i32, %c0_i32_0 : i32, i32
  }
  func.func @transform_10(%arg0: i32) -> (i32, i32) {
    %c0_i32 = arith.constant 0 : i32
    %c0_i32_0 = arith.constant 0 : i32
    %c0_i32_1 = arith.constant 0 : i32
    return %c0_i32, %c0_i32_0 : i32, i32
  }
  func.func @transform_11(%arg0: i32) -> (i32, i32) {
    %c0_i32 = arith.constant 0 : i32
    %c0_i32_0 = arith.constant 0 : i32
    %c0_i32_1 = arith.constant 0 : i32
    return %c0_i32, %c0_i32_0 : i32, i32
  }
  func.func @transform_12(%arg0: i32) -> (i32, i32) {
    %c0_i32 = arith.constant 0 : i32
    %c0_i32_0 = arith.constant 0 : i32
    %c0_i32_1 = arith.constant 0 : i32
    return %c0_i32, %c0_i32_0 : i32, i32
  }
  func.func @transform_13(%arg0: i32) -> (i32, i32) {
    %c0_i32 = arith.constant 0 : i32
    %c0_i32_0 = arith.constant 0 : i32
    %c0_i32_1 = arith.constant 0 : i32
    return %c0_i32, %c0_i32_0 : i32, i32
  }
  func.func @transform_14(%arg0: i32) -> (i32, i32) {
    %c0_i32 = arith.constant 0 : i32
    %c0_i32_0 = arith.constant 0 : i32
    %c0_i32_1 = arith.constant 0 : i32
    return %c0_i32, %c0_i32_0 : i32, i32
  }
  func.func @transform_15(%arg0: i32) -> (i32, i32) {
    %c0_i32 = arith.constant 0 : i32
    %c0_i32_0 = arith.constant 0 : i32
    %c0_i32_1 = arith.constant 0 : i32
    return %c0_i32, %c0_i32_0 : i32, i32
  }
  func.func @transform_16(%arg0: i32) -> (i32, i32) {
    %c0_i32 = arith.constant 0 : i32
    %c0_i32_0 = arith.constant 0 : i32
    %c0_i32_1 = arith.constant 0 : i32
    return %c0_i32, %c0_i32_0 : i32, i32
  }
}

</mosaic_0001>

<llo_original>
// kernel: block_forward.1
$region0: #{block_forward.1}
  #allocation0 [shape = 'u32[]', space=smem, size = 0x4, offset = 0x4, fixed_abs, tag = 'smem constant byte address 0x4 - core index']
  #allocation1 [shape = 'u32[144,128]{1,0:T(1,128)}', space=vmem, size = 0x12000, scoped, tag = 'internal scratch']
  %s0 = inlined_call_operand.vmem [shape: f32[32,64], index: 0, kind: input, shape index: {}]
  %s1 = inlined_call_operand.vmem [shape: f32[64,64], index: 1, kind: input, shape index: {}]
  %s2 = inlined_call_operand.vmem [shape: f32[64,64], index: 2, kind: input, shape index: {}]
  %s3 = inlined_call_operand.vmem [shape: f32[64,64], index: 3, kind: input, shape index: {}]
  %s4 = inlined_call_operand.vmem [shape: f32[64,64], index: 4, kind: input, shape index: {}]
  %s5 = inlined_call_operand.vmem [shape: f32[1,64], index: 5, kind: input, shape index: {}]
  %s6 = inlined_call_operand.vmem [shape: f32[1,64], index: 6, kind: input, shape index: {}]
  %s7 = inlined_call_operand.vmem [shape: f32[1,64], index: 7, kind: input, shape index: {}]
  %s8 = inlined_call_operand.vmem [shape: f32[64,256], index: 8, kind: input, shape index: {}]
  %s9 = inlined_call_operand.vmem [shape: f32[1,256], index: 9, kind: input, shape index: {}]
  %s10 = inlined_call_operand.vmem [shape: f32[256,64], index: 10, kind: input, shape index: {}]
  %s11 = inlined_call_operand.vmem [shape: f32[1,64], index: 11, kind: input, shape index: {}]
  %s12 = inlined_call_operand.vmem [shape: f32[1,64], index: 12, kind: input, shape index: {}]
  %s13 = inlined_call_operand.vmem [shape: f32[1,64], index: 13, kind: input, shape index: {}]
  %s14 = inlined_call_operand.vmem [shape: f32[128,64], index: 14, kind: input, shape index: {}]
  %s15 = inlined_call_operand.vmem [shape: f32[32,128], index: 15, kind: input, shape index: {}]
  %s16 = inlined_call_operand.hbm [shape: f32[32,64], index: 16, kind: output, shape index: {}]
  %s17 = sld [smem:[#allocation0]]
  $region74: #{block_forward.1} parent=0
    _
  %s19 = ssub.s32 1, %s17
  %s20 = scalar_select 0, %s19, %s17
  $region1: #{block_forward.1} parent=0
    #allocation2 [shape = 'u8[16384]{0}', space=vmem, size = 0x4000, scoped, tag = 'output window, operand 0, single buffered']
    #allocation3 [shape = 's32[1]{0}', space=sflag, size = 0x4, scoped, tag = 'scoped memory for block_forward.1']
    %21 = vsyncpa [#allocation3], 0
    // Predicated region
    $region2: #{block_forward.1} parent=1 // pred_check
      _
    $region3: #{block_forward.1} parent=1 // pred_check_branch
      %23 = sbr.rel (0) target = $region5
    $region4: #{block_forward.1} parent=1 // pred_region
      _
    $region5: #{block_forward.1} parent=1 // pred_fallthru
      _
    // Predicated region
    $region6: #{block_forward.1} parent=1 // pred_check
      _
    $region7: #{block_forward.1} parent=1 // pred_check_branch
      %25 = sbr.rel (0) target = $region9
    $region8: #{block_forward.1} parent=1 // pred_region
      _
    $region9: #{block_forward.1} parent=1 // pred_fallthru
      _
    // Predicated region
    $region10: #{block_forward.1} parent=1 // pred_check
      _
    $region11: #{block_forward.1} parent=1 // pred_check_branch
      %27 = sbr.rel (0) target = $region13
    $region12: #{block_forward.1} parent=1 // pred_region
      _
    $region13: #{block_forward.1} parent=1 // pred_fallthru
      _
    // Predicated region
    $region14: #{block_forward.1} parent=1 // pred_check
      _
    $region15: #{block_forward.1} parent=1 // pred_check_branch
      %29 = sbr.rel (0) target = $region17
    $region16: #{block_forward.1} parent=1 // pred_region
      _
    $region17: #{block_forward.1} parent=1 // pred_fallthru
      _
    // Predicated region
    $region18: #{block_forward.1} parent=1 // pred_check
      _
    $region19: #{block_forward.1} parent=1 // pred_check_branch
      %31 = sbr.rel (0) target = $region21
    $region20: #{block_forward.1} parent=1 // pred_region
      _
    $region21: #{block_forward.1} parent=1 // pred_fallthru
      _
    // Predicated region
    $region22: #{block_forward.1} parent=1 // pred_check
      _
    $region23: #{block_forward.1} parent=1 // pred_check_branch
      %33 = sbr.rel (0) target = $region25
    $region24: #{block_forward.1} parent=1 // pred_region
      _
    $region25: #{block_forward.1} parent=1 // pred_fallthru
      _
    // Predicated region
    $region26: #{block_forward.1} parent=1 // pred_check
      _
    $region27: #{block_forward.1} parent=1 // pred_check_branch
      %35 = sbr.rel (0) target = $region29
    $region28: #{block_forward.1} parent=1 // pred_region
      _
    $region29: #{block_forward.1} parent=1 // pred_fallthru
      _
    // Predicated region
    $region30: #{block_forward.1} parent=1 // pred_check
      _
    $region31: #{block_forward.1} parent=1 // pred_check_branch
      %37 = sbr.rel (0) target = $region33
    $region32: #{block_forward.1} parent=1 // pred_region
      _
    $region33: #{block_forward.1} parent=1 // pred_fallthru
      _
    // Predicated region
    $region34: #{block_forward.1} parent=1 // pred_check
      _
    $region35: #{block_forward.1} parent=1 // pred_check_branch
      %39 = sbr.rel (0) target = $region37
    $region36: #{block_forward.1} parent=1 // pred_region
      _
    $region37: #{block_forward.1} parent=1 // pred_fallthru
      _
    // Predicated region
    $region38: #{block_forward.1} parent=1 // pred_check
      _
    $region39: #{block_forward.1} parent=1 // pred_check_branch
      %41 = sbr.rel (0) target = $region41
    $region40: #{block_forward.1} parent=1 // pred_region
      _
    $region41: #{block_forward.1} parent=1 // pred_fallthru
      _
    // Predicated region
    $region42: #{block_forward.1} parent=1 // pred_check
      _
    $region43: #{block_forward.1} parent=1 // pred_check_branch
      %43 = sbr.rel (0) target = $region45
    $region44: #{block_forward.1} parent=1 // pred_region
      _
    $region45: #{block_forward.1} parent=1 // pred_fallthru
      _
    // Predicated region
    $region46: #{block_forward.1} parent=1 // pred_check
      _
    $region47: #{block_forward.1} parent=1 // pred_check_branch
      %45 = sbr.rel (0) target = $region49
    $region48: #{block_forward.1} parent=1 // pred_region
      _
    $region49: #{block_forward.1} parent=1 // pred_fallthru
      _
    // Predicated region
    $region50: #{block_forward.1} parent=1 // pred_check
      _
    $region51: #{block_forward.1} parent=1 // pred_check_branch
      %47 = sbr.rel (0) target = $region53
    $region52: #{block_forward.1} parent=1 // pred_region
      _
    $region53: #{block_forward.1} parent=1 // pred_fallthru
      _
    // Predicated region
    $region54: #{block_forward.1} parent=1 // pred_check
      _
    $region55: #{block_forward.1} parent=1 // pred_check_branch
      %49 = sbr.rel (0) target = $region57
    $region56: #{block_forward.1} parent=1 // pred_region
      _
    $region57: #{block_forward.1} parent=1 // pred_fallthru
      _
    // Predicated region
    $region58: #{block_forward.1} parent=1 // pred_check
      _
    $region59: #{block_forward.1} parent=1 // pred_check_branch
      %51 = sbr.rel (0) target = $region61
    $region60: #{block_forward.1} parent=1 // pred_region
      _
    $region61: #{block_forward.1} parent=1 // pred_fallthru
      _
    // Predicated region
    $region62: #{block_forward.1} parent=1 // pred_check
      _
    $region63: #{block_forward.1} parent=1 // pred_check_branch
      %53 = sbr.rel (0) target = $region65
    $region64: #{block_forward.1} parent=1 // pred_region
      _
    $region65: #{block_forward.1} parent=1 // pred_fallthru
      _
    %v54 = vld [vmem:[%s0] sm:$0xff]
    %v55 = vld [vmem:[%s0 + $0x8] sm:$0xff]
    %v56 = vld [vmem:[%s0 + $0x10] sm:$0xff]
    %v57 = vld [vmem:[%s0 + $0x18] sm:$0xff]
    %v58 = vld [vmem:[%s1] sm:$0xff]
    %v59 = vld [vmem:[%s1 + $0x8] sm:$0xff]
    %v60 = vld [vmem:[%s1 + $0x10] sm:$0xff]
    %v61 = vld [vmem:[%s1 + $0x18] sm:$0xff]
    %v62 = vld [vmem:[%s1 + $0x20] sm:$0xff]
    %v63 = vld [vmem:[%s1 + $0x28] sm:$0xff]
    %v64 = vld [vmem:[%s1 + $0x30] sm:$0xff]
    %v65 = vld [vmem:[%s1 + $0x38] sm:$0xff]
    %vm66 = vcmask 523264
    %v68 = vsel %vm66, %v54, 0
    %v71 = vsel %vm66, %v55, 0
    %v74 = vsel %vm66, %v56, 0
    %v77 = vsel %vm66, %v57, 0
    %79 = vmatprep.subr.mxu0 0.0
    %80 = vmatpush1.msra.mxu0 0.0
    %81 = vmatprep.subr.mxu0 0.0
    %82 = vmatpush1.msra.mxu0 0.0
    %83 = vmatprep.subr.mxu0 0.0
    %84 = vmatpush1.msra.mxu0 0.0
    %85 = vmatprep.subr.mxu0 0.0
    %86 = vmatpush1.msra.mxu0 0.0
    %87 = vmatprep.subr.mxu0 0.0
    %88 = vmatpush1.msra.mxu0 0.0
    %89 = vmatprep.subr.mxu0 0.0
    %90 = vmatpush1.msra.mxu0 0.0
    %91 = vmatprep.subr.mxu0 0.0
    %92 = vmatpush1.msra.mxu0 0.0
    %93 = vmatprep.subr.mxu0 0.0
    %94 = vmatpush1.msra.mxu0 0.0
    %95 = vmatprep.subr.mxu0 0.0
    %96 = vmatpush1.msra.mxu0 %v65
    %97 = vmatprep.subr.mxu0 0.0
    %98 = vmatpush1.msra.mxu0 %v64
    %99 = vmatprep.subr.mxu0 0.0
    %100 = vmatpush1.msra.mxu0 %v63
    %101 = vmatprep.subr.mxu0 0.0
    %102 = vmatpush1.msra.mxu0 %v62
    %103 = vmatprep.subr.mxu0 0.0
    %104 = vmatpush1.msra.mxu0 %v61
    %105 = vmatprep.subr.mxu0 0.0
    %106 = vmatpush1.msra.mxu0 %v60
    %107 = vmatprep.subr.mxu0 0.0
    %108 = vmatpush1.msra.mxu0 %v59
    %109 = vmatprep.subr.mxu0 0.0
    %110 = vmatpush1.msra.mxu0 %v58
    %111 = vmatprep.subr.mxu0 0.0
    %112 = vmatpush2.msra.mxu0 0.0
    %113 = vmatprep.subr.mxu0 0.0
    %114 = vmatpush2.msra.mxu0 0.0
    %115 = vmatprep.subr.mxu0 0.0
    %116 = vmatpush2.msra.mxu0 0.0
    %117 = vmatprep.subr.mxu0 0.0
    %118 = vmatpush2.msra.mxu0 0.0
    %119 = vmatprep.subr.mxu0 0.0
    %120 = vmatpush2.msra.mxu0 0.0
    %121 = vmatprep.subr.mxu0 0.0
    %122 = vmatpush2.msra.mxu0 0.0
    %123 = vmatprep.subr.mxu0 0.0
    %124 = vmatpush2.msra.mxu0 0.0
    %125 = vmatprep.subr.mxu0 0.0
    %126 = vmatpush2.msra.mxu0 0.0
    %127 = vmatprep.subr.mxu0 0.0
    %128 = vmatpush2.msra.mxu0 0.0
    %129 = vmatprep.subr.mxu0 0.0
    %130 = vmatpush2.msra.mxu0 0.0
    %131 = vmatprep.subr.mxu0 0.0
    %132 = vmatpush2.msra.mxu0 0.0
    %133 = vmatprep.subr.mxu0 0.0
    %134 = vmatpush2.msra.mxu0 0.0
    %135 = vmatprep.subr.mxu0 0.0
    %136 = vmatpush2.msra.mxu0 0.0
    %137 = vmatprep.subr.mxu0 0.0
    %138 = vmatpush2.msra.mxu0 0.0
    %139 = vmatprep.subr.mxu0 0.0
    %140 = vmatpush2.msra.mxu0 0.0
    %141 = vmatprep.subr.mxu0 0.0
    %142 = vmatpush2.msra.mxu0 0.0
    %143 = vmatprep.mubr.f32.mxu0 0.0
    %144 = vmatmul.mubr.f32.gmra.mxu0 %v68
    %v145 = vpop.f32.mrf.mxu0
    %v146 = vadd.f32 0.0, %v145
    %v147 = vpop.f32.mrf.mxu0
    %148 = vmatprep.mubr.f32.mxu0 0.0
    %149 = vmatmul.mubr.f32.gmra.mxu0 %v71
    %v150 = vpop.f32.mrf.mxu0
    %v151 = vadd.f32 0.0, %v150
    %v152 = vpop.f32.mrf.mxu0
    %153 = vmatprep.mubr.f32.mxu0 0.0
    %154 = vmatmul.mubr.f32.gmra.mxu0 %v74
    %v155 = vpop.f32.mrf.mxu0
    %v156 = vadd.f32 0.0, %v155
    %v157 = vpop.f32.mrf.mxu0
    %158 = vmatprep.mubr.f32.mxu0 0.0
    %159 = vmatmul.mubr.f32.gmra.mxu0 %v77
    %v160 = vpop.f32.mrf.mxu0
    %v161 = vadd.f32 0.0, %v160
    %v162 = vpop.f32.mrf.mxu0
    %163 = vdwg.mxu0
    %v164 = vld [vmem:[%s2] sm:$0xff]
    %v165 = vld [vmem:[%s2 + $0x8] sm:$0xff]
    %v166 = vld [vmem:[%s2 + $0x10] sm:$0xff]
    %v167 = vld [vmem:[%s2 + $0x18] sm:$0xff]
    %v168 = vld [vmem:[%s2 + $0x20] sm:$0xff]
    %v169 = vld [vmem:[%s2 + $0x28] sm:$0xff]
    %v170 = vld [vmem:[%s2 + $0x30] sm:$0xff]
    %v171 = vld [vmem:[%s2 + $0x38] sm:$0xff]
    %172 = vmatprep.subr.mxu0 0.0
    %173 = vmatpush1.msra.mxu0 0.0
    %174 = vmatprep.subr.mxu0 0.0
    %175 = vmatpush1.msra.mxu0 0.0
    %176 = vmatprep.subr.mxu0 0.0
    %177 = vmatpush1.msra.mxu0 0.0
    %178 = vmatprep.subr.mxu0 0.0
    %179 = vmatpush1.msra.mxu0 0.0
    %180 = vmatprep.subr.mxu0 0.0
    %181 = vmatpush1.msra.mxu0 0.0
    %182 = vmatprep.subr.mxu0 0.0
    %183 = vmatpush1.msra.mxu0 0.0
    %184 = vmatprep.subr.mxu0 0.0
    %185 = vmatpush1.msra.mxu0 0.0
    %186 = vmatprep.subr.mxu0 0.0
    %187 = vmatpush1.msra.mxu0 0.0
    %188 = vmatprep.subr.mxu0 0.0
    %189 = vmatpush1.msra.mxu0 %v171
    %190 = vmatprep.subr.mxu0 0.0
    %191 = vmatpush1.msra.mxu0 %v170
    %192 = vmatprep.subr.mxu0 0.0
    %193 = vmatpush1.msra.mxu0 %v169
    %194 = vmatprep.subr.mxu0 0.0
    %195 = vmatpush1.msra.mxu0 %v168
    %196 = vmatprep.subr.mxu0 0.0
    %197 = vmatpush1.msra.mxu0 %v167
    %198 = vmatprep.subr.mxu0 0.0
    %199 = vmatpush1.msra.mxu0 %v166
    %200 = vmatprep.subr.mxu0 0.0
    %201 = vmatpush1.msra.mxu0 %v165
    %202 = vmatprep.subr.mxu0 0.0
    %203 = vmatpush1.msra.mxu0 %v164
    %204 = vmatprep.subr.mxu0 0.0
    %205 = vmatpush2.msra.mxu0 0.0
    %206 = vmatprep.subr.mxu0 0.0
    %207 = vmatpush2.msra.mxu0 0.0
    %208 = vmatprep.subr.mxu0 0.0
    %209 = vmatpush2.msra.mxu0 0.0
    %210 = vmatprep.subr.mxu0 0.0
    %211 = vmatpush2.msra.mxu0 0.0
    %212 = vmatprep.subr.mxu0 0.0
    %213 = vmatpush2.msra.mxu0 0.0
    %214 = vmatprep.subr.mxu0 0.0
    %215 = vmatpush2.msra.mxu0 0.0
    %216 = vmatprep.subr.mxu0 0.0
    %217 = vmatpush2.msra.mxu0 0.0
    %218 = vmatprep.subr.mxu0 0.0
    %219 = vmatpush2.msra.mxu0 0.0
    %220 = vmatprep.subr.mxu0 0.0
    %221 = vmatpush2.msra.mxu0 0.0
    %222 = vmatprep.subr.mxu0 0.0
    %223 = vmatpush2.msra.mxu0 0.0
    %224 = vmatprep.subr.mxu0 0.0
    %225 = vmatpush2.msra.mxu0 0.0
    %226 = vmatprep.subr.mxu0 0.0
    %227 = vmatpush2.msra.mxu0 0.0
    %228 = vmatprep.subr.mxu0 0.0
    %229 = vmatpush2.msra.mxu0 0.0
    %230 = vmatprep.subr.mxu0 0.0
    %231 = vmatpush2.msra.mxu0 0.0
    %232 = vmatprep.subr.mxu0 0.0
    %233 = vmatpush2.msra.mxu0 0.0
    %234 = vmatprep.subr.mxu0 0.0
    %235 = vmatpush2.msra.mxu0 0.0
    %236 = vmatprep.mubr.f32.mxu0 0.0
    %237 = vmatmul.mubr.f32.gmra.mxu0 %v68
    %v238 = vpop.f32.mrf.mxu0
    %v239 = vadd.f32 0.0, %v238
    %v240 = vpop.f32.mrf.mxu0
    %241 = vmatprep.mubr.f32.mxu0 0.0
    %242 = vmatmul.mubr.f32.gmra.mxu0 %v71
    %v243 = vpop.f32.mrf.mxu0
    %v244 = vadd.f32 0.0, %v243
    %v245 = vpop.f32.mrf.mxu0
    %246 = vmatprep.mubr.f32.mxu0 0.0
    %247 = vmatmul.mubr.f32.gmra.mxu0 %v74
    %v248 = vpop.f32.mrf.mxu0
    %v249 = vadd.f32 0.0, %v248
    %v250 = vpop.f32.mrf.mxu0
    %251 = vmatprep.mubr.f32.mxu0 0.0
    %252 = vmatmul.mubr.f32.gmra.mxu0 %v77
    %v253 = vpop.f32.mrf.mxu0
    %v254 = vadd.f32 0.0, %v253
    %v255 = vpop.f32.mrf.mxu0
    %256 = vdwg.mxu0
    %v257 = vld [vmem:[%s3] sm:$0xff]
    %v258 = vld [vmem:[%s3 + $0x8] sm:$0xff]
    %v259 = vld [vmem:[%s3 + $0x10] sm:$0xff]
    %v260 = vld [vmem:[%s3 + $0x18] sm:$0xff]
    %v261 = vld [vmem:[%s3 + $0x20] sm:$0xff]
    %v262 = vld [vmem:[%s3 + $0x28] sm:$0xff]
    %v263 = vld [vmem:[%s3 + $0x30] sm:$0xff]
    %v264 = vld [vmem:[%s3 + $0x38] sm:$0xff]
    %265 = vmatprep.subr.mxu0 0.0
    %266 = vmatpush1.msra.mxu0 0.0
    %267 = vmatprep.subr.mxu0 0.0
    %268 = vmatpush1.msra.mxu0 0.0
    %269 = vmatprep.subr.mxu0 0.0
    %270 = vmatpush1.msra.mxu0 0.0
    %271 = vmatprep.subr.mxu0 0.0
    %272 = vmatpush1.msra.mxu0 0.0
    %273 = vmatprep.subr.mxu0 0.0
    %274 = vmatpush1.msra.mxu0 0.0
    %275 = vmatprep.subr.mxu0 0.0
    %276 = vmatpush1.msra.mxu0 0.0
    %277 = vmatprep.subr.mxu0 0.0
    %278 = vmatpush1.msra.mxu0 0.0
    %279 = vmatprep.subr.mxu0 0.0
    %280 = vmatpush1.msra.mxu0 0.0
    %281 = vmatprep.subr.mxu0 0.0
    %282 = vmatpush1.msra.mxu0 %v264
    %283 = vmatprep.subr.mxu0 0.0
    %284 = vmatpush1.msra.mxu0 %v263
    %285 = vmatprep.subr.mxu0 0.0
    %286 = vmatpush1.msra.mxu0 %v262
    %287 = vmatprep.subr.mxu0 0.0
    %288 = vmatpush1.msra.mxu0 %v261
    %289 = vmatprep.subr.mxu0 0.0
    %290 = vmatpush1.msra.mxu0 %v260
    %291 = vmatprep.subr.mxu0 0.0
    %292 = vmatpush1.msra.mxu0 %v259
    %293 = vmatprep.subr.mxu0 0.0
    %294 = vmatpush1.msra.mxu0 %v258
    %295 = vmatprep.subr.mxu0 0.0
    %296 = vmatpush1.msra.mxu0 %v257
    %297 = vmatprep.subr.mxu0 0.0
    %298 = vmatpush2.msra.mxu0 0.0
    %299 = vmatprep.subr.mxu0 0.0
    %300 = vmatpush2.msra.mxu0 0.0
    %301 = vmatprep.subr.mxu0 0.0
    %302 = vmatpush2.msra.mxu0 0.0
    %303 = vmatprep.subr.mxu0 0.0
    %304 = vmatpush2.msra.mxu0 0.0
    %305 = vmatprep.subr.mxu0 0.0
    %306 = vmatpush2.msra.mxu0 0.0
    %307 = vmatprep.subr.mxu0 0.0
    %308 = vmatpush2.msra.mxu0 0.0
    %309 = vmatprep.subr.mxu0 0.0
    %310 = vmatpush2.msra.mxu0 0.0
    %311 = vmatprep.subr.mxu0 0.0
    %312 = vmatpush2.msra.mxu0 0.0
    %313 = vmatprep.subr.mxu0 0.0
    %314 = vmatpush2.msra.mxu0 0.0
    %315 = vmatprep.subr.mxu0 0.0
    %316 = vmatpush2.msra.mxu0 0.0
    %317 = vmatprep.subr.mxu0 0.0
    %318 = vmatpush2.msra.mxu0 0.0
    %319 = vmatprep.subr.mxu0 0.0
    %320 = vmatpush2.msra.mxu0 0.0
    %321 = vmatprep.subr.mxu0 0.0
    %322 = vmatpush2.msra.mxu0 0.0
    %323 = vmatprep.subr.mxu0 0.0
    %324 = vmatpush2.msra.mxu0 0.0
    %325 = vmatprep.subr.mxu0 0.0
    %326 = vmatpush2.msra.mxu0 0.0
    %327 = vmatprep.subr.mxu0 0.0
    %328 = vmatpush2.msra.mxu0 0.0
    %329 = vmatprep.mubr.f32.mxu0 0.0
    %330 = vmatmul.mubr.f32.gmra.mxu0 %v68
    %v331 = vpop.f32.mrf.mxu0
    %v332 = vadd.f32 0.0, %v331
    %v333 = vpop.f32.mrf.mxu0
    %334 = vmatprep.mubr.f32.mxu0 0.0
    %335 = vmatmul.mubr.f32.gmra.mxu0 %v71
    %v336 = vpop.f32.mrf.mxu0
    %v337 = vadd.f32 0.0, %v336
    %v338 = vpop.f32.mrf.mxu0
    %339 = vmatprep.mubr.f32.mxu0 0.0
    %340 = vmatmul.mubr.f32.gmra.mxu0 %v74
    %v341 = vpop.f32.mrf.mxu0
    %v342 = vadd.f32 0.0, %v341
    %v343 = vpop.f32.mrf.mxu0
    %344 = vmatprep.mubr.f32.mxu0 0.0
    %345 = vmatmul.mubr.f32.gmra.mxu0 %v77
    %v346 = vpop.f32.mrf.mxu0
    %v347 = vadd.f32 0.0, %v346
    %v348 = vpop.f32.mrf.mxu0
    %349 = vdwg.mxu0
    %v350 = vld [vmem:[%s14] sm:$0xff]
    %v351 = vld [vmem:[%s14 + $0x8] sm:$0xff]
    %v352 = vld [vmem:[%s14 + $0x10] sm:$0xff]
    %v353 = vld [vmem:[%s14 + $0x18] sm:$0xff]
    %v354 = vld [vmem:[%s14 + $0x20] sm:$0xff]
    %v355 = vld [vmem:[%s14 + $0x28] sm:$0xff]
    %v356 = vld [vmem:[%s14 + $0x30] sm:$0xff]
    %v357 = vld [vmem:[%s14 + $0x38] sm:$0xff]
    %v358 = vld [vmem:[%s14 + $0x40] sm:$0xff]
    %v359 = vld [vmem:[%s14 + $0x48] sm:$0xff]
    %v360 = vld [vmem:[%s14 + $0x50] sm:$0xff]
    %v361 = vld [vmem:[%s14 + $0x58] sm:$0xff]
    %v362 = vld [vmem:[%s14 + $0x60] sm:$0xff]
    %v363 = vld [vmem:[%s14 + $0x68] sm:$0xff]
    %v364 = vld [vmem:[%s14 + $0x70] sm:$0xff]
    %v365 = vld [vmem:[%s14 + $0x78] sm:$0xff]
    %v366 = vmul.f32 %v239, %v350
    %v367 = vmul.f32 %v244, %v351
    %v368 = vmul.f32 %v249, %v352
    %v369 = vmul.f32 %v254, %v353
    %v370 = vmul.f32 %v239, %v354
    %v371 = vmul.f32 %v244, %v355
    %v372 = vmul.f32 %v249, %v356
    %v373 = vmul.f32 %v254, %v357
    %v374 = vmul.f32 %v239, %v358
    %v375 = vmul.f32 %v244, %v359
    %v376 = vmul.f32 %v249, %v360
    %v377 = vmul.f32 %v254, %v361
    %v378 = vmul.f32 %v239, %v362
    %v379 = vmul.f32 %v244, %v363
    %v380 = vmul.f32 %v249, %v364
    %v381 = vmul.f32 %v254, %v365
    %v382 = vmul.f32 %v332, %v350
    %v383 = vmul.f32 %v337, %v351
    %v384 = vmul.f32 %v342, %v352
    %v385 = vmul.f32 %v347, %v353
    %v386 = vmul.f32 %v332, %v354
    %v387 = vmul.f32 %v337, %v355
    %v388 = vmul.f32 %v342, %v356
    %v389 = vmul.f32 %v347, %v357
    %v390 = vmul.f32 %v332, %v358
    %v391 = vmul.f32 %v337, %v359
    %v392 = vmul.f32 %v342, %v360
    %v393 = vmul.f32 %v347, %v361
    %v394 = vmul.f32 %v332, %v362
    %v395 = vmul.f32 %v337, %v363
    %v396 = vmul.f32 %v342, %v364
    %v397 = vmul.f32 %v347, %v365
    %v399 = vsel %vm66, %v146, 0
    %v402 = vsel %vm66, %v151, 0
    %v405 = vsel %vm66, %v156, 0
    %v408 = vsel %vm66, %v161, 0
    %v411 = vsel %vm66, %v366, 0
    %v414 = vsel %vm66, %v367, 0
    %v417 = vsel %vm66, %v368, 0
    %v420 = vsel %vm66, %v369, 0
    %v423 = vsel %vm66, %v370, 0
    %v426 = vsel %vm66, %v371, 0
    %v429 = vsel %vm66, %v372, 0
    %v432 = vsel %vm66, %v373, 0
    %v435 = vsel %vm66, %v374, 0
    %v438 = vsel %vm66, %v375, 0
    %v441 = vsel %vm66, %v376, 0
    %v444 = vsel %vm66, %v377, 0
    %v447 = vsel %vm66, %v378, 0
    %v450 = vsel %vm66, %v379, 0
    %v453 = vsel %vm66, %v380, 0
    %v456 = vsel %vm66, %v381, 0
    %458 = vmatprep.subr.mxu0 0.0
    %459 = vmatpush1.xpose.msra.mxu0 %v456
    %460 = vmatprep.subr.mxu0 0.0
    %461 = vmatpush1.xpose.msra.mxu0 %v453
    %462 = vmatprep.subr.mxu0 0.0
    %463 = vmatpush1.xpose.msra.mxu0 %v450
    %464 = vmatprep.subr.mxu0 0.0
    %465 = vmatpush1.xpose.msra.mxu0 %v447
    %466 = vmatprep.subr.mxu0 0.0
    %467 = vmatpush1.xpose.msra.mxu0 %v444
    %468 = vmatprep.subr.mxu0 0.0
    %469 = vmatpush1.xpose.msra.mxu0 %v441
    %470 = vmatprep.subr.mxu0 0.0
    %471 = vmatpush1.xpose.msra.mxu0 %v438
    %472 = vmatprep.subr.mxu0 0.0
    %473 = vmatpush1.xpose.msra.mxu0 %v435
    %474 = vmatprep.subr.mxu0 0.0
    %475 = vmatpush1.xpose.msra.mxu0 %v432
    %476 = vmatprep.subr.mxu0 0.0
    %477 = vmatpush1.xpose.msra.mxu0 %v429
    %478 = vmatprep.subr.mxu0 0.0
    %479 = vmatpush1.xpose.msra.mxu0 %v426
    %480 = vmatprep.subr.mxu0 0.0
    %481 = vmatpush1.xpose.msra.mxu0 %v423
    %482 = vmatprep.subr.mxu0 0.0
    %483 = vmatpush1.xpose.msra.mxu0 %v420
    %484 = vmatprep.subr.mxu0 0.0
    %485 = vmatpush1.xpose.msra.mxu0 %v417
    %486 = vmatprep.subr.mxu0 0.0
    %487 = vmatpush1.xpose.msra.mxu0 %v414
    %488 = vmatprep.subr.mxu0 0.0
    %489 = vmatpush1.xpose.msra.mxu0 %v411
    %490 = vmatprep.subr.mxu0 0.0
    %491 = vmatpush2.xpose.msra.mxu0 0.0
    %492 = vmatprep.subr.mxu0 0.0
    %493 = vmatpush2.xpose.msra.mxu0 0.0
    %494 = vmatprep.subr.mxu0 0.0
    %495 = vmatpush2.xpose.msra.mxu0 0.0
    %496 = vmatprep.subr.mxu0 0.0
    %497 = vmatpush2.xpose.msra.mxu0 0.0
    %498 = vmatprep.subr.mxu0 0.0
    %499 = vmatpush2.xpose.msra.mxu0 0.0
    %500 = vmatprep.subr.mxu0 0.0
    %501 = vmatpush2.xpose.msra.mxu0 0.0
    %502 = vmatprep.subr.mxu0 0.0
    %503 = vmatpush2.xpose.msra.mxu0 0.0
    %504 = vmatprep.subr.mxu0 0.0
    %505 = vmatpush2.xpose.msra.mxu0 0.0
    %506 = vmatprep.subr.mxu0 0.0
    %507 = vmatpush2.xpose.msra.mxu0 0.0
    %508 = vmatprep.subr.mxu0 0.0
    %509 = vmatpush2.xpose.msra.mxu0 0.0
    %510 = vmatprep.subr.mxu0 0.0
    %511 = vmatpush2.xpose.msra.mxu0 0.0
    %512 = vmatprep.subr.mxu0 0.0
    %513 = vmatpush2.xpose.msra.mxu0 0.0
    %514 = vmatprep.subr.mxu0 0.0
    %515 = vmatpush2.xpose.msra.mxu0 0.0
    %516 = vmatprep.subr.mxu0 0.0
    %517 = vmatpush2.xpose.msra.mxu0 0.0
    %518 = vmatprep.subr.mxu0 0.0
    %519 = vmatpush2.xpose.msra.mxu0 0.0
    %520 = vmatprep.subr.mxu0 0.0
    %521 = vmatpush2.xpose.msra.mxu0 0.0
    %522 = vmatprep.mubr.f32.mxu0 0.0
    %523 = vmatmul.mubr.f32.gmra.mxu0 %v399
    %v524 = vpop.f32.mrf.mxu0
    %v525 = vadd.f32 0.0, %v524
    %v526 = vpop.f32.mrf.mxu0
    %527 = vmatprep.mubr.f32.mxu0 0.0
    %528 = vmatmul.mubr.f32.gmra.mxu0 %v402
    %v529 = vpop.f32.mrf.mxu0
    %v530 = vadd.f32 0.0, %v529
    %v531 = vpop.f32.mrf.mxu0
    %532 = vmatprep.mubr.f32.mxu0 0.0
    %533 = vmatmul.mubr.f32.gmra.mxu0 %v405
    %v534 = vpop.f32.mrf.mxu0
    %v535 = vadd.f32 0.0, %v534
    %v536 = vpop.f32.mrf.mxu0
    %537 = vmatprep.mubr.f32.mxu0 0.0
    %538 = vmatmul.mubr.f32.gmra.mxu0 %v408
    %v539 = vpop.f32.mrf.mxu0
    %v540 = vadd.f32 0.0, %v539
    %v541 = vpop.f32.mrf.mxu0
    %542 = vdwg.mxu0
    %v543 = vmul.f32 %v525, 0.25
    %v544 = vmul.f32 %v530, 0.25
    %v545 = vmul.f32 %v535, 0.25
    %v546 = vmul.f32 %v540, 0.25
    %v547 = vld [vmem:[%s15] sm:$0xff]
    %v548 = vld [vmem:[%s15 + $0x8] sm:$0xff]
    %v549 = vld [vmem:[%s15 + $0x10] sm:$0xff]
    %v550 = vld [vmem:[%s15 + $0x18] sm:$0xff]
    %v551 = vadd.f32 %v543, %v547
    %v552 = vadd.f32 %v544, %v548
    %v553 = vadd.f32 %v545, %v549
    %v554 = vadd.f32 %v546, %v550
    %555 = vmax.xlane.f32.xlu0 %v551
    %v556 = vpop.xlane.xlu0 %555
    %557 = vmax.xlane.f32.xlu0 %v552
    %v558 = vpop.xlane.xlu0 %557
    %559 = vmax.xlane.f32.xlu0 %v553
    %v560 = vpop.xlane.xlu0 %559
    %561 = vmax.xlane.f32.xlu0 %v554
    %v562 = vpop.xlane.xlu0 %561
    %v563 = vsub.f32 %v551, %v556
    %v564 = vsub.f32 %v552, %v558
    %v565 = vsub.f32 %v553, %v560
    %v566 = vsub.f32 %v554, %v562
    %v567 = vmul.f32 %v563, 1.442695
    %v568 = vpow.pop %v567
    %v569 = vmul.f32 %v564, 1.442695
    %v570 = vpow.pop %v569
    %v571 = vmul.f32 %v565, 1.442695
    %v572 = vpow.pop %v571
    %v573 = vmul.f32 %v566, 1.442695
    %v574 = vpow.pop %v573
    %575 = vmatprep.subr.mxu0 0.0
    %576 = vmatpush1.msra.mxu0 %v397
    %577 = vmatprep.subr.mxu0 0.0
    %578 = vmatpush1.msra.mxu0 %v396
    %579 = vmatprep.subr.mxu0 0.0
    %580 = vmatpush1.msra.mxu0 %v395
    %581 = vmatprep.subr.mxu0 0.0
    %582 = vmatpush1.msra.mxu0 %v394
    %583 = vmatprep.subr.mxu0 0.0
    %584 = vmatpush1.msra.mxu0 %v393
    %585 = vmatprep.subr.mxu0 0.0
    %586 = vmatpush1.msra.mxu0 %v392
    %587 = vmatprep.subr.mxu0 0.0
    %588 = vmatpush1.msra.mxu0 %v391
    %589 = vmatprep.subr.mxu0 0.0
    %590 = vmatpush1.msra.mxu0 %v390
    %591 = vmatprep.subr.mxu0 0.0
    %592 = vmatpush1.msra.mxu0 %v389
    %593 = vmatprep.subr.mxu0 0.0
    %594 = vmatpush1.msra.mxu0 %v388
    %595 = vmatprep.subr.mxu0 0.0
    %596 = vmatpush1.msra.mxu0 %v387
    %597 = vmatprep.subr.mxu0 0.0
    %598 = vmatpush1.msra.mxu0 %v386
    %599 = vmatprep.subr.mxu0 0.0
    %600 = vmatpush1.msra.mxu0 %v385
    %601 = vmatprep.subr.mxu0 0.0
    %602 = vmatpush1.msra.mxu0 %v384
    %603 = vmatprep.subr.mxu0 0.0
    %604 = vmatpush1.msra.mxu0 %v383
    %605 = vmatprep.subr.mxu0 0.0
    %606 = vmatpush1.msra.mxu0 %v382
    %607 = vmatprep.subr.mxu0 0.0
    %608 = vmatpush2.msra.mxu0 0.0
    %609 = vmatprep.subr.mxu0 0.0
    %610 = vmatpush2.msra.mxu0 0.0
    %611 = vmatprep.subr.mxu0 0.0
    %612 = vmatpush2.msra.mxu0 0.0
    %613 = vmatprep.subr.mxu0 0.0
    %614 = vmatpush2.msra.mxu0 0.0
    %615 = vmatprep.subr.mxu0 0.0
    %616 = vmatpush2.msra.mxu0 0.0
    %617 = vmatprep.subr.mxu0 0.0
    %618 = vmatpush2.msra.mxu0 0.0
    %619 = vmatprep.subr.mxu0 0.0
    %620 = vmatpush2.msra.mxu0 0.0
    %621 = vmatprep.subr.mxu0 0.0
    %622 = vmatpush2.msra.mxu0 0.0
    %623 = vmatprep.subr.mxu0 0.0
    %624 = vmatpush2.msra.mxu0 0.0
    %625 = vmatprep.subr.mxu0 0.0
    %626 = vmatpush2.msra.mxu0 0.0
    %627 = vmatprep.subr.mxu0 0.0
    %628 = vmatpush2.msra.mxu0 0.0
    %629 = vmatprep.subr.mxu0 0.0
    %630 = vmatpush2.msra.mxu0 0.0
    %631 = vmatprep.subr.mxu0 0.0
    %632 = vmatpush2.msra.mxu0 0.0
    %633 = vmatprep.subr.mxu0 0.0
    %634 = vmatpush2.msra.mxu0 0.0
    %635 = vmatprep.subr.mxu0 0.0
    %636 = vmatpush2.msra.mxu0 0.0
    %637 = vmatprep.subr.mxu0 0.0
    %638 = vmatpush2.msra.mxu0 0.0
    %639 = vmatprep.mubr.f32.mxu0 0.0
    %640 = vmatmul.mubr.f32.gmra.mxu0 %v568
    %v641 = vpop.f32.mrf.mxu0
    %v642 = vadd.f32 0.0, %v641
    %v643 = vpop.f32.mrf.mxu0
    %644 = vmatprep.mubr.f32.mxu0 0.0
    %645 = vmatmul.mubr.f32.gmra.mxu0 %v570
    %v646 = vpop.f32.mrf.mxu0
    %v647 = vadd.f32 0.0, %v646
    %v648 = vpop.f32.mrf.mxu0
    %649 = vmatprep.mubr.f32.mxu0 0.0
    %650 = vmatmul.mubr.f32.gmra.mxu0 %v572
    %v651 = vpop.f32.mrf.mxu0
    %v652 = vadd.f32 0.0, %v651
    %v653 = vpop.f32.mrf.mxu0
    %654 = vmatprep.mubr.f32.mxu0 0.0
    %655 = vmatmul.mubr.f32.gmra.mxu0 %v574
    %v656 = vpop.f32.mrf.mxu0
    %v657 = vadd.f32 0.0, %v656
    %v658 = vpop.f32.mrf.mxu0
    %659 = vdwg.mxu0
    %660 = vmatprep.subr.mxu0 0.0
    %661 = vmatpush1.msra.mxu0 %v365
    %662 = vmatprep.subr.mxu0 0.0
    %663 = vmatpush1.msra.mxu0 %v364
    %664 = vmatprep.subr.mxu0 0.0
    %665 = vmatpush1.msra.mxu0 %v363
    %666 = vmatprep.subr.mxu0 0.0
    %667 = vmatpush1.msra.mxu0 %v362
    %668 = vmatprep.subr.mxu0 0.0
    %669 = vmatpush1.msra.mxu0 %v361
    %670 = vmatprep.subr.mxu0 0.0
    %671 = vmatpush1.msra.mxu0 %v360
    %672 = vmatprep.subr.mxu0 0.0
    %673 = vmatpush1.msra.mxu0 %v359
    %674 = vmatprep.subr.mxu0 0.0
    %675 = vmatpush1.msra.mxu0 %v358
    %676 = vmatprep.subr.mxu0 0.0
    %677 = vmatpush1.msra.mxu0 %v357
    %678 = vmatprep.subr.mxu0 0.0
    %679 = vmatpush1.msra.mxu0 %v356
    %680 = vmatprep.subr.mxu0 0.0
    %681 = vmatpush1.msra.mxu0 %v355
    %682 = vmatprep.subr.mxu0 0.0
    %683 = vmatpush1.msra.mxu0 %v354
    %684 = vmatprep.subr.mxu0 0.0
    %685 = vmatpush1.msra.mxu0 %v353
    %686 = vmatprep.subr.mxu0 0.0
    %687 = vmatpush1.msra.mxu0 %v352
    %688 = vmatprep.subr.mxu0 0.0
    %689 = vmatpush1.msra.mxu0 %v351
    %690 = vmatprep.subr.mxu0 0.0
    %691 = vmatpush1.msra.mxu0 %v350
    %692 = vmatprep.subr.mxu0 0.0
    %693 = vmatpush2.msra.mxu0 0.0
    %694 = vmatprep.subr.mxu0 0.0
    %695 = vmatpush2.msra.mxu0 0.0
    %696 = vmatprep.subr.mxu0 0.0
    %697 = vmatpush2.msra.mxu0 0.0
    %698 = vmatprep.subr.mxu0 0.0
    %699 = vmatpush2.msra.mxu0 0.0
    %700 = vmatprep.subr.mxu0 0.0
    %701 = vmatpush2.msra.mxu0 0.0
    %702 = vmatprep.subr.mxu0 0.0
    %703 = vmatpush2.msra.mxu0 0.0
    %704 = vmatprep.subr.mxu0 0.0
    %705 = vmatpush2.msra.mxu0 0.0
    %706 = vmatprep.subr.mxu0 0.0
    %707 = vmatpush2.msra.mxu0 0.0
    %708 = vmatprep.subr.mxu0 0.0
    %709 = vmatpush2.msra.mxu0 0.0
    %710 = vmatprep.subr.mxu0 0.0
    %711 = vmatpush2.msra.mxu0 0.0
    %712 = vmatprep.subr.mxu0 0.0
    %713 = vmatpush2.msra.mxu0 0.0
    %714 = vmatprep.subr.mxu0 0.0
    %715 = vmatpush2.msra.mxu0 0.0
    %716 = vmatprep.subr.mxu0 0.0
    %717 = vmatpush2.msra.mxu0 0.0
    %718 = vmatprep.subr.mxu0 0.0
    %719 = vmatpush2.msra.mxu0 0.0
    %720 = vmatprep.subr.mxu0 0.0
    %721 = vmatpush2.msra.mxu0 0.0
    %722 = vmatprep.subr.mxu0 0.0
    %723 = vmatpush2.msra.mxu0 0.0
    %724 = vmatprep.mubr.f32.mxu0 0.0
    %725 = vmatmul.mubr.f32.gmra.mxu0 %v568
    %v726 = vpop.f32.mrf.mxu0
    %v727 = vadd.f32 0.0, %v726
    %v728 = vpop.f32.mrf.mxu0
    %729 = vmatprep.mubr.f32.mxu0 0.0
    %730 = vmatmul.mubr.f32.gmra.mxu0 %v570
    %v731 = vpop.f32.mrf.mxu0
    %v732 = vadd.f32 0.0, %v731
    %v733 = vpop.f32.mrf.mxu0
    %734 = vmatprep.mubr.f32.mxu0 0.0
    %735 = vmatmul.mubr.f32.gmra.mxu0 %v572
    %v736 = vpop.f32.mrf.mxu0
    %v737 = vadd.f32 0.0, %v736
    %v738 = vpop.f32.mrf.mxu0
    %739 = vmatprep.mubr.f32.mxu0 0.0
    %740 = vmatmul.mubr.f32.gmra.mxu0 %v574
    %v741 = vpop.f32.mrf.mxu0
    %v742 = vadd.f32 0.0, %v741
    %v743 = vpop.f32.mrf.mxu0
    %744 = vdwg.mxu0
    %v745 = vrcp.pop %v727
    %v746 = vmul.f32 %v642, %v745
    %v747 = vrcp.pop %v732
    %v748 = vmul.f32 %v647, %v747
    %v749 = vrcp.pop %v737
    %v750 = vmul.f32 %v652, %v749
    %v751 = vrcp.pop %v742
    %v752 = vmul.f32 %v657, %v751
    %v753 = vld [vmem:[%s4] sm:$0xff]
    %v754 = vld [vmem:[%s4 + $0x8] sm:$0xff]
    %v755 = vld [vmem:[%s4 + $0x10] sm:$0xff]
    %v756 = vld [vmem:[%s4 + $0x18] sm:$0xff]
    %v757 = vld [vmem:[%s4 + $0x20] sm:$0xff]
    %v758 = vld [vmem:[%s4 + $0x28] sm:$0xff]
    %v759 = vld [vmem:[%s4 + $0x30] sm:$0xff]
    %v760 = vld [vmem:[%s4 + $0x38] sm:$0xff]
    %v761 = vld [vmem:[%s5] sm:$0x1]
    %v763 = vlaneseq
    %v764 = vshrl.u32 %v763, 7
    %v765 = vsub.s32 0, %v764
    %v766 = vrot.slane %v761, %v765
    %v769 = vsel %vm66, %v746, 0
    %v772 = vsel %vm66, %v748, 0
    %v775 = vsel %vm66, %v750, 0
    %v778 = vsel %vm66, %v752, 0
    %780 = vmatprep.subr.mxu0 0.0
    %781 = vmatpush1.msra.mxu0 0.0
    %782 = vmatprep.subr.mxu0 0.0
    %783 = vmatpush1.msra.mxu0 0.0
    %784 = vmatprep.subr.mxu0 0.0
    %785 = vmatpush1.msra.mxu0 0.0
    %786 = vmatprep.subr.mxu0 0.0
    %787 = vmatpush1.msra.mxu0 0.0
    %788 = vmatprep.subr.mxu0 0.0
    %789 = vmatpush1.msra.mxu0 0.0
    %790 = vmatprep.subr.mxu0 0.0
    %791 = vmatpush1.msra.mxu0 0.0
    %792 = vmatprep.subr.mxu0 0.0
    %793 = vmatpush1.msra.mxu0 0.0
    %794 = vmatprep.subr.mxu0 0.0
    %795 = vmatpush1.msra.mxu0 0.0
    %796 = vmatprep.subr.mxu0 0.0
    %797 = vmatpush1.msra.mxu0 %v760
    %798 = vmatprep.subr.mxu0 0.0
    %799 = vmatpush1.msra.mxu0 %v759
    %800 = vmatprep.subr.mxu0 0.0
    %801 = vmatpush1.msra.mxu0 %v758
    %802 = vmatprep.subr.mxu0 0.0
    %803 = vmatpush1.msra.mxu0 %v757
    %804 = vmatprep.subr.mxu0 0.0
    %805 = vmatpush1.msra.mxu0 %v756
    %806 = vmatprep.subr.mxu0 0.0
    %807 = vmatpush1.msra.mxu0 %v755
    %808 = vmatprep.subr.mxu0 0.0
    %809 = vmatpush1.msra.mxu0 %v754
    %810 = vmatprep.subr.mxu0 0.0
    %811 = vmatpush1.msra.mxu0 %v753
    %812 = vmatprep.subr.mxu0 0.0
    %813 = vmatpush2.msra.mxu0 0.0
    %814 = vmatprep.subr.mxu0 0.0
    %815 = vmatpush2.msra.mxu0 0.0
    %816 = vmatprep.subr.mxu0 0.0
    %817 = vmatpush2.msra.mxu0 0.0
    %818 = vmatprep.subr.mxu0 0.0
    %819 = vmatpush2.msra.mxu0 0.0
    %820 = vmatprep.subr.mxu0 0.0
    %821 = vmatpush2.msra.mxu0 0.0
    %822 = vmatprep.subr.mxu0 0.0
    %823 = vmatpush2.msra.mxu0 0.0
    %824 = vmatprep.subr.mxu0 0.0
    %825 = vmatpush2.msra.mxu0 0.0
    %826 = vmatprep.subr.mxu0 0.0
    %827 = vmatpush2.msra.mxu0 0.0
    %828 = vmatprep.subr.mxu0 0.0
    %829 = vmatpush2.msra.mxu0 0.0
    %830 = vmatprep.subr.mxu0 0.0
    %831 = vmatpush2.msra.mxu0 0.0
    %832 = vmatprep.subr.mxu0 0.0
    %833 = vmatpush2.msra.mxu0 0.0
    %834 = vmatprep.subr.mxu0 0.0
    %835 = vmatpush2.msra.mxu0 0.0
    %836 = vmatprep.subr.mxu0 0.0
    %837 = vmatpush2.msra.mxu0 0.0
    %838 = vmatprep.subr.mxu0 0.0
    %839 = vmatpush2.msra.mxu0 0.0
    %840 = vmatprep.subr.mxu0 0.0
    %841 = vmatpush2.msra.mxu0 0.0
    %842 = vmatprep.subr.mxu0 0.0
    %843 = vmatpush2.msra.mxu0 0.0
    %844 = vmatprep.mubr.f32.mxu0 0.0
    %845 = vmatmul.mubr.f32.gmra.mxu0 %v769
    %v846 = vpop.f32.mrf.mxu0
    %v847 = vadd.f32 %v766, %v846
    %v848 = vpop.f32.mrf.mxu0
    %849 = vmatprep.mubr.f32.mxu0 0.0
    %850 = vmatmul.mubr.f32.gmra.mxu0 %v772
    %v851 = vpop.f32.mrf.mxu0
    %v852 = vadd.f32 %v766, %v851
    %v853 = vpop.f32.mrf.mxu0
    %854 = vmatprep.mubr.f32.mxu0 0.0
    %855 = vmatmul.mubr.f32.gmra.mxu0 %v775
    %v856 = vpop.f32.mrf.mxu0
    %v857 = vadd.f32 %v766, %v856
    %v858 = vpop.f32.mrf.mxu0
    %859 = vmatprep.mubr.f32.mxu0 0.0
    %860 = vmatmul.mubr.f32.gmra.mxu0 %v778
    %v861 = vpop.f32.mrf.mxu0
    %v862 = vadd.f32 %v766, %v861
    %v863 = vpop.f32.mrf.mxu0
    %864 = vdwg.mxu0
    %v865 = vadd.f32 %v54, %v847
    %v866 = vadd.f32 %v55, %v852
    %v867 = vadd.f32 %v56, %v857
    %v868 = vadd.f32 %v57, %v862
    %v869 = vld [vmem:[%s6] sm:$0x1]
    %v870 = vld [vmem:[%s7] sm:$0x1]
    %v871 = vsel %vm66, %v865, 0.0
    %872 = vadd.xlane.f32.xlu0 %v871
    %v873 = vpop.xlane.xlu0 %872
    %v874 = vsel %vm66, %v866, 0.0
    %875 = vadd.xlane.f32.xlu0 %v874
    %v876 = vpop.xlane.xlu0 %875
    %v877 = vsel %vm66, %v867, 0.0
    %878 = vadd.xlane.f32.xlu0 %v877
    %v879 = vpop.xlane.xlu0 %878
    %v880 = vsel %vm66, %v868, 0.0
    %881 = vadd.xlane.f32.xlu0 %v880
    %v882 = vpop.xlane.xlu0 %881
    %v883 = vmul.f32 %v865, %v865
    %v884 = vmul.f32 %v866, %v866
    %v885 = vmul.f32 %v867, %v867
    %v886 = vmul.f32 %v868, %v868
    %v887 = vsel %vm66, %v883, 0.0
    %888 = vadd.xlane.f32.xlu0 %v887
    %v889 = vpop.xlane.xlu0 %888
    %v890 = vsel %vm66, %v884, 0.0
    %891 = vadd.xlane.f32.xlu0 %v890
    %v892 = vpop.xlane.xlu0 %891
    %v893 = vsel %vm66, %v885, 0.0
    %894 = vadd.xlane.f32.xlu0 %v893
    %v895 = vpop.xlane.xlu0 %894
    %v896 = vsel %vm66, %v886, 0.0
    %897 = vadd.xlane.f32.xlu0 %v896
    %v898 = vpop.xlane.xlu0 %897
    %v899 = vmul.f32 %v873, 0.015625
    %v900 = vmul.f32 %v876, 0.015625
    %v901 = vmul.f32 %v879, 0.015625
    %v902 = vmul.f32 %v882, 0.015625
    %v903 = vmul.f32 %v889, 0.015625
    %v904 = vmul.f32 %v892, 0.015625
    %v905 = vmul.f32 %v895, 0.015625
    %v906 = vmul.f32 %v898, 0.015625
    %v907 = vmul.f32 %v899, %v899
    %v908 = vmul.f32 %v900, %v900
    %v909 = vmul.f32 %v901, %v901
    %v910 = vmul.f32 %v902, %v902
    %v911 = vsub.f32 %v903, %v907
    %v912 = vsub.f32 %v904, %v908
    %v913 = vsub.f32 %v905, %v909
    %v914 = vsub.f32 %v906, %v910
    %v915 = vsub.f32 %v865, %v899
    %v916 = vsub.f32 %v866, %v900
    %v917 = vsub.f32 %v867, %v901
    %v918 = vsub.f32 %v868, %v902
    %v919 = vadd.f32 %v911, 1e-06
    %v920 = vadd.f32 %v912, 1e-06
    %v921 = vadd.f32 %v913, 1e-06
    %v922 = vadd.f32 %v914, 1e-06
    %v923 = vrsqrt.pop %v919
    %v924 = vrsqrt.pop %v920
    %v925 = vrsqrt.pop %v921
    %v926 = vrsqrt.pop %v922
    %v927 = vmul.f32 %v915, %v923
    %v928 = vmul.f32 %v916, %v924
    %v929 = vmul.f32 %v917, %v925
    %v930 = vmul.f32 %v918, %v926
    %v932 = vlaneseq
    %v933 = vshrl.u32 %v932, 7
    %v934 = vsub.s32 0, %v933
    %v935 = vrot.slane %v869, %v934
    %v937 = vmul.f32 %v927, %v935
    %v938 = vmul.f32 %v928, %v935
    %v939 = vmul.f32 %v929, %v935
    %v940 = vmul.f32 %v930, %v935
    %v942 = vlaneseq
    %v943 = vshrl.u32 %v942, 7
    %v944 = vsub.s32 0, %v943
    %v945 = vrot.slane %v870, %v944
    %v947 = vadd.f32 %v937, %v945
    %v948 = vadd.f32 %v938, %v945
    %v949 = vadd.f32 %v939, %v945
    %v950 = vadd.f32 %v940, %v945
    %v951 = vld [vmem:[%s8] sm:$0xff]
    %v952 = vld [vmem:[%s8 + $0x8] sm:$0xff]
    %v953 = vld [vmem:[%s8 + $0x10] sm:$0xff]
    %v954 = vld [vmem:[%s8 + $0x18] sm:$0xff]
    %v955 = vld [vmem:[%s8 + $0x20] sm:$0xff]
    %v956 = vld [vmem:[%s8 + $0x28] sm:$0xff]
    %v957 = vld [vmem:[%s8 + $0x30] sm:$0xff]
    %v958 = vld [vmem:[%s8 + $0x38] sm:$0xff]
    %v959 = vld [vmem:[%s8 + $0x40] sm:$0xff]
    %v960 = vld [vmem:[%s8 + $0x48] sm:$0xff]
    %v961 = vld [vmem:[%s8 + $0x50] sm:$0xff]
    %v962 = vld [vmem:[%s8 + $0x58] sm:$0xff]
    %v963 = vld [vmem:[%s8 + $0x60] sm:$0xff]
    %v964 = vld [vmem:[%s8 + $0x68] sm:$0xff]
    %v965 = vld [vmem:[%s8 + $0x70] sm:$0xff]
    %v966 = vld [vmem:[%s8 + $0x78] sm:$0xff]
    %v967 = vld [vmem:[%s9] sm:$0x3]
    %v969 = vlaneseq
    %v970 = vshrl.u32 %v969, 7
    %v971 = vsub.s32 0, %v970
    %v972 = vrot.slane %v967, %v971
    %v973 = vlaneseq
    %v974 = vshrl.u32 %v973, 7
    %v975 = vsub.s32 1, %v974
    %v976 = vrot.slane %v967, %v975
    %v980 = vsel %vm66, %v947, 0
    %v983 = vsel %vm66, %v948, 0
    %v986 = vsel %vm66, %v949, 0
    %v989 = vsel %vm66, %v950, 0
    %991 = vmatprep.subr.mxu0 0.0
    %992 = vmatpush1.msra.mxu0 0.0
    %993 = vmatprep.subr.mxu0 0.0
    %994 = vmatpush1.msra.mxu0 0.0
    %995 = vmatprep.subr.mxu0 0.0
    %996 = vmatpush1.msra.mxu0 0.0
    %997 = vmatprep.subr.mxu0 0.0
    %998 = vmatpush1.msra.mxu0 0.0
    %999 = vmatprep.subr.mxu0 0.0
    %1000 = vmatpush1.msra.mxu0 0.0
    %1001 = vmatprep.subr.mxu0 0.0
    %1002 = vmatpush1.msra.mxu0 0.0
    %1003 = vmatprep.subr.mxu0 0.0
    %1004 = vmatpush1.msra.mxu0 0.0
    %1005 = vmatprep.subr.mxu0 0.0
    %1006 = vmatpush1.msra.mxu0 0.0
    %1007 = vmatprep.subr.mxu0 %v966
    %1008 = vmatpush1.msra.mxu0 %v965
    %1009 = vmatprep.subr.mxu0 %v964
    %1010 = vmatpush1.msra.mxu0 %v963
    %1011 = vmatprep.subr.mxu0 %v962
    %1012 = vmatpush1.msra.mxu0 %v961
    %1013 = vmatprep.subr.mxu0 %v960
    %1014 = vmatpush1.msra.mxu0 %v959
    %1015 = vmatprep.subr.mxu0 %v958
    %1016 = vmatpush1.msra.mxu0 %v957
    %1017 = vmatprep.subr.mxu0 %v956
    %1018 = vmatpush1.msra.mxu0 %v955
    %1019 = vmatprep.subr.mxu0 %v954
    %1020 = vmatpush1.msra.mxu0 %v953
    %1021 = vmatprep.subr.mxu0 %v952
    %1022 = vmatpush1.msra.mxu0 %v951
    %1023 = vmatprep.subr.mxu0 0.0
    %1024 = vmatpush2.msra.mxu0 0.0
    %1025 = vmatprep.subr.mxu0 0.0
    %1026 = vmatpush2.msra.mxu0 0.0
    %1027 = vmatprep.subr.mxu0 0.0
    %1028 = vmatpush2.msra.mxu0 0.0
    %1029 = vmatprep.subr.mxu0 0.0
    %1030 = vmatpush2.msra.mxu0 0.0
    %1031 = vmatprep.subr.mxu0 0.0
    %1032 = vmatpush2.msra.mxu0 0.0
    %1033 = vmatprep.subr.mxu0 0.0
    %1034 = vmatpush2.msra.mxu0 0.0
    %1035 = vmatprep.subr.mxu0 0.0
    %1036 = vmatpush2.msra.mxu0 0.0
    %1037 = vmatprep.subr.mxu0 0.0
    %1038 = vmatpush2.msra.mxu0 0.0
    %1039 = vmatprep.subr.mxu0 0.0
    %1040 = vmatpush2.msra.mxu0 0.0
    %1041 = vmatprep.subr.mxu0 0.0
    %1042 = vmatpush2.msra.mxu0 0.0
    %1043 = vmatprep.subr.mxu0 0.0
    %1044 = vmatpush2.msra.mxu0 0.0
    %1045 = vmatprep.subr.mxu0 0.0
    %1046 = vmatpush2.msra.mxu0 0.0
    %1047 = vmatprep.subr.mxu0 0.0
    %1048 = vmatpush2.msra.mxu0 0.0
    %1049 = vmatprep.subr.mxu0 0.0
    %1050 = vmatpush2.msra.mxu0 0.0
    %1051 = vmatprep.subr.mxu0 0.0
    %1052 = vmatpush2.msra.mxu0 0.0
    %1053 = vmatprep.subr.mxu0 0.0
    %1054 = vmatpush2.msra.mxu0 0.0
    %1055 = vmatprep.mubr.f32.mxu0 0.0
    %1056 = vmatmul.mubr.f32.gmra.mxu0 %v980
    %v1057 = vpop.f32.mrf.mxu0
    %v1058 = vadd.f32 %v972, %v1057
    %v1059 = vpop.f32.mrf.mxu0
    %v1060 = vadd.f32 %v976, %v1059
    %1061 = vmatprep.mubr.f32.mxu0 0.0
    %1062 = vmatmul.mubr.f32.gmra.mxu0 %v983
    %v1063 = vpop.f32.mrf.mxu0
    %v1064 = vadd.f32 %v972, %v1063
    %v1065 = vpop.f32.mrf.mxu0
    %v1066 = vadd.f32 %v976, %v1065
    %1067 = vmatprep.mubr.f32.mxu0 0.0
    %1068 = vmatmul.mubr.f32.gmra.mxu0 %v986
    %v1069 = vpop.f32.mrf.mxu0
    %v1070 = vadd.f32 %v972, %v1069
    %v1071 = vpop.f32.mrf.mxu0
    %v1072 = vadd.f32 %v976, %v1071
    %1073 = vmatprep.mubr.f32.mxu0 0.0
    %1074 = vmatmul.mubr.f32.gmra.mxu0 %v989
    %v1075 = vpop.f32.mrf.mxu0
    %v1076 = vadd.f32 %v972, %v1075
    %v1077 = vpop.f32.mrf.mxu0
    %v1078 = vadd.f32 %v976, %v1077
    %1079 = vdwg.mxu0
    %v1080 = vmul.f32 %v1058, 0.5
    %v1081 = vmul.f32 %v1060, 0.5
    %v1082 = vmul.f32 %v1064, 0.5
    %v1083 = vmul.f32 %v1066, 0.5
    %v1084 = vmul.f32 %v1070, 0.5
    %v1085 = vmul.f32 %v1072, 0.5
    %v1086 = vmul.f32 %v1076, 0.5
    %v1087 = vmul.f32 %v1078, 0.5
    %v1088 = vmul.f32 %v1058, 0.70710677
    %v1089 = vmul.f32 %v1060, 0.70710677
    %v1090 = vmul.f32 %v1064, 0.70710677
    %v1091 = vmul.f32 %v1066, 0.70710677
    %v1092 = vmul.f32 %v1070, 0.70710677
    %v1093 = vmul.f32 %v1072, 0.70710677
    %v1094 = vmul.f32 %v1076, 0.70710677
    %v1095 = vmul.f32 %v1078, 0.70710677
    %v1096 = vand.u32 2147483647, %v1088
    %v1097 = vand.u32 2147483647, %v1089
    %v1098 = vand.u32 2147483647, %v1090
    %v1099 = vand.u32 2147483647, %v1091
    %v1100 = vand.u32 2147483647, %v1092
    %v1101 = vand.u32 2147483647, %v1093
    %v1102 = vand.u32 2147483647, %v1094
    %v1103 = vand.u32 2147483647, %v1095
    %v1104 = vmul.f32 %v1096, 0.3275911
    %v1105 = vmul.f32 %v1097, 0.3275911
    %v1106 = vmul.f32 %v1098, 0.3275911
    %v1107 = vmul.f32 %v1099, 0.3275911
    %v1108 = vmul.f32 %v1100, 0.3275911
    %v1109 = vmul.f32 %v1101, 0.3275911
    %v1110 = vmul.f32 %v1102, 0.3275911
    %v1111 = vmul.f32 %v1103, 0.3275911
    %v1112 = vadd.f32 %v1104, 1.0
    %v1113 = vadd.f32 %v1105, 1.0
    %v1114 = vadd.f32 %v1106, 1.0
    %v1115 = vadd.f32 %v1107, 1.0
    %v1116 = vadd.f32 %v1108, 1.0
    %v1117 = vadd.f32 %v1109, 1.0
    %v1118 = vadd.f32 %v1110, 1.0
    %v1119 = vadd.f32 %v1111, 1.0
    %v1120 = vrcp.pop %v1112
    %v1121 = vmul.f32 1.0, %v1120
    %v1122 = vrcp.pop %v1113
    %v1123 = vmul.f32 1.0, %v1122
    %v1124 = vrcp.pop %v1114
    %v1125 = vmul.f32 1.0, %v1124
    %v1126 = vrcp.pop %v1115
    %v1127 = vmul.f32 1.0, %v1126
    %v1128 = vrcp.pop %v1116
    %v1129 = vmul.f32 1.0, %v1128
    %v1130 = vrcp.pop %v1117
    %v1131 = vmul.f32 1.0, %v1130
    %v1132 = vrcp.pop %v1118
    %v1133 = vmul.f32 1.0, %v1132
    %v1134 = vrcp.pop %v1119
    %v1135 = vmul.f32 1.0, %v1134
    %v1136 = vmul.f32 %v1121, 1.0614054
    %v1137 = vmul.f32 %v1123, 1.0614054
    %v1138 = vmul.f32 %v1125, 1.0614054
    %v1139 = vmul.f32 %v1127, 1.0614054
    %v1140 = vmul.f32 %v1129, 1.0614054
    %v1141 = vmul.f32 %v1131, 1.0614054
    %v1142 = vmul.f32 %v1133, 1.0614054
    %v1143 = vmul.f32 %v1135, 1.0614054
    %v1144 = vadd.f32 %v1136, -1.4531521
    %v1145 = vadd.f32 %v1137, -1.4531521
    %v1146 = vadd.f32 %v1138, -1.4531521
    %v1147 = vadd.f32 %v1139, -1.4531521
    %v1148 = vadd.f32 %v1140, -1.4531521
    %v1149 = vadd.f32 %v1141, -1.4531521
    %v1150 = vadd.f32 %v1142, -1.4531521
    %v1151 = vadd.f32 %v1143, -1.4531521
    %v1152 = vmul.f32 %v1144, %v1121
    %v1153 = vmul.f32 %v1145, %v1123
    %v1154 = vmul.f32 %v1146, %v1125
    %v1155 = vmul.f32 %v1147, %v1127
    %v1156 = vmul.f32 %v1148, %v1129
    %v1157 = vmul.f32 %v1149, %v1131
    %v1158 = vmul.f32 %v1150, %v1133
    %v1159 = vmul.f32 %v1151, %v1135
    %v1160 = vadd.f32 %v1152, 1.4214138
    %v1161 = vadd.f32 %v1153, 1.4214138
    %v1162 = vadd.f32 %v1154, 1.4214138
    %v1163 = vadd.f32 %v1155, 1.4214138
    %v1164 = vadd.f32 %v1156, 1.4214138
    %v1165 = vadd.f32 %v1157, 1.4214138
    %v1166 = vadd.f32 %v1158, 1.4214138
    %v1167 = vadd.f32 %v1159, 1.4214138
    %v1168 = vmul.f32 %v1160, %v1121
    %v1169 = vmul.f32 %v1161, %v1123
    %v1170 = vmul.f32 %v1162, %v1125
    %v1171 = vmul.f32 %v1163, %v1127
    %v1172 = vmul.f32 %v1164, %v1129
    %v1173 = vmul.f32 %v1165, %v1131
    %v1174 = vmul.f32 %v1166, %v1133
    %v1175 = vmul.f32 %v1167, %v1135
    %v1176 = vadd.f32 %v1168, -0.28449672
    %v1177 = vadd.f32 %v1169, -0.28449672
    %v1178 = vadd.f32 %v1170, -0.28449672
    %v1179 = vadd.f32 %v1171, -0.28449672
    %v1180 = vadd.f32 %v1172, -0.28449672
    %v1181 = vadd.f32 %v1173, -0.28449672
    %v1182 = vadd.f32 %v1174, -0.28449672
    %v1183 = vadd.f32 %v1175, -0.28449672
    %v1184 = vmul.f32 %v1176, %v1121
    %v1185 = vmul.f32 %v1177, %v1123
    %v1186 = vmul.f32 %v1178, %v1125
    %v1187 = vmul.f32 %v1179, %v1127
    %v1188 = vmul.f32 %v1180, %v1129
    %v1189 = vmul.f32 %v1181, %v1131
    %v1190 = vmul.f32 %v1182, %v1133
    %v1191 = vmul.f32 %v1183, %v1135
    %v1192 = vadd.f32 %v1184, 0.2548296
    %v1193 = vadd.f32 %v1185, 0.2548296
    %v1194 = vadd.f32 %v1186, 0.2548296
    %v1195 = vadd.f32 %v1187, 0.2548296
    %v1196 = vadd.f32 %v1188, 0.2548296
    %v1197 = vadd.f32 %v1189, 0.2548296
    %v1198 = vadd.f32 %v1190, 0.2548296
    %v1199 = vadd.f32 %v1191, 0.2548296
    %v1200 = vmul.f32 %v1192, %v1121
    %v1201 = vmul.f32 %v1193, %v1123
    %v1202 = vmul.f32 %v1194, %v1125
    %v1203 = vmul.f32 %v1195, %v1127
    %v1204 = vmul.f32 %v1196, %v1129
    %v1205 = vmul.f32 %v1197, %v1131
    %v1206 = vmul.f32 %v1198, %v1133
    %v1207 = vmul.f32 %v1199, %v1135
    %v1208 = vsub.f32 0.0, %v1096
    %v1209 = vsub.f32 0.0, %v1097
    %v1210 = vsub.f32 0.0, %v1098
    %v1211 = vsub.f32 0.0, %v1099
    %v1212 = vsub.f32 0.0, %v1100
    %v1213 = vsub.f32 0.0, %v1101
    %v1214 = vsub.f32 0.0, %v1102
    %v1215 = vsub.f32 0.0, %v1103
    %v1216 = vmul.f32 %v1208, %v1096
    %v1217 = vmul.f32 %v1209, %v1097
    %v1218 = vmul.f32 %v1210, %v1098
    %v1219 = vmul.f32 %v1211, %v1099
    %v1220 = vmul.f32 %v1212, %v1100
    %v1221 = vmul.f32 %v1213, %v1101
    %v1222 = vmul.f32 %v1214, %v1102
    %v1223 = vmul.f32 %v1215, %v1103
    %v1224 = vmul.f32 %v1216, 1.442695
    %v1225 = vpow.pop %v1224
    %v1226 = vmul.f32 %v1217, 1.442695
    %v1227 = vpow.pop %v1226
    %v1228 = vmul.f32 %v1218, 1.442695
    %v1229 = vpow.pop %v1228
    %v1230 = vmul.f32 %v1219, 1.442695
    %v1231 = vpow.pop %v1230
    %v1232 = vmul.f32 %v1220, 1.442695
    %v1233 = vpow.pop %v1232
    %v1234 = vmul.f32 %v1221, 1.442695
    %v1235 = vpow.pop %v1234
    %v1236 = vmul.f32 %v1222, 1.442695
    %v1237 = vpow.pop %v1236
    %v1238 = vmul.f32 %v1223, 1.442695
    %v1239 = vpow.pop %v1238
    %v1240 = vmul.f32 %v1200, %v1225
    %v1241 = vmul.f32 %v1201, %v1227
    %v1242 = vmul.f32 %v1202, %v1229
    %v1243 = vmul.f32 %v1203, %v1231
    %v1244 = vmul.f32 %v1204, %v1233
    %v1245 = vmul.f32 %v1205, %v1235
    %v1246 = vmul.f32 %v1206, %v1237
    %v1247 = vmul.f32 %v1207, %v1239
    %v1248 = vsub.f32 1.0, %v1240
    %v1249 = vsub.f32 1.0, %v1241
    %v1250 = vsub.f32 1.0, %v1242
    %v1251 = vsub.f32 1.0, %v1243
    %v1252 = vsub.f32 1.0, %v1244
    %v1253 = vsub.f32 1.0, %v1245
    %v1254 = vsub.f32 1.0, %v1246
    %v1255 = vsub.f32 1.0, %v1247
    %vm1256 = vcmp.ge.f32.partialorder %v1088, 0.0
    %vm1257 = vcmp.ge.f32.partialorder %v1089, 0.0
    %vm1258 = vcmp.ge.f32.partialorder %v1090, 0.0
    %vm1259 = vcmp.ge.f32.partialorder %v1091, 0.0
    %vm1260 = vcmp.ge.f32.partialorder %v1092, 0.0
    %vm1261 = vcmp.ge.f32.partialorder %v1093, 0.0
    %vm1262 = vcmp.ge.f32.partialorder %v1094, 0.0
    %vm1263 = vcmp.ge.f32.partialorder %v1095, 0.0
    %v1264 = vsub.f32 0.0, %v1248
    %v1265 = vsub.f32 0.0, %v1249
    %v1266 = vsub.f32 0.0, %v1250
    %v1267 = vsub.f32 0.0, %v1251
    %v1268 = vsub.f32 0.0, %v1252
    %v1269 = vsub.f32 0.0, %v1253
    %v1270 = vsub.f32 0.0, %v1254
    %v1271 = vsub.f32 0.0, %v1255
    %v1272 = vsel %vm1256, %v1248, %v1264
    %v1273 = vsel %vm1257, %v1249, %v1265
    %v1274 = vsel %vm1258, %v1250, %v1266
    %v1275 = vsel %vm1259, %v1251, %v1267
    %v1276 = vsel %vm1260, %v1252, %v1268
    %v1277 = vsel %vm1261, %v1253, %v1269
    %v1278 = vsel %vm1262, %v1254, %v1270
    %v1279 = vsel %vm1263, %v1255, %v1271
    %v1280 = vadd.f32 %v1272, 1.0
    %v1281 = vadd.f32 %v1273, 1.0
    %v1282 = vadd.f32 %v1274, 1.0
    %v1283 = vadd.f32 %v1275, 1.0
    %v1284 = vadd.f32 %v1276, 1.0
    %v1285 = vadd.f32 %v1277, 1.0
    %v1286 = vadd.f32 %v1278, 1.0
    %v1287 = vadd.f32 %v1279, 1.0
    %v1288 = vmul.f32 %v1080, %v1280
    %v1289 = vmul.f32 %v1081, %v1281
    %v1290 = vmul.f32 %v1082, %v1282
    %v1291 = vmul.f32 %v1083, %v1283
    %v1292 = vmul.f32 %v1084, %v1284
    %v1293 = vmul.f32 %v1085, %v1285
    %v1294 = vmul.f32 %v1086, %v1286
    %v1295 = vmul.f32 %v1087, %v1287
    %v1296 = vld [vmem:[%s10] sm:$0xff]
    %v1297 = vld [vmem:[%s10 + $0x8] sm:$0xff]
    %v1298 = vld [vmem:[%s10 + $0x10] sm:$0xff]
    %v1299 = vld [vmem:[%s10 + $0x18] sm:$0xff]
    %v1300 = vld [vmem:[%s10 + $0x20] sm:$0xff]
    %v1301 = vld [vmem:[%s10 + $0x28] sm:$0xff]
    %v1302 = vld [vmem:[%s10 + $0x30] sm:$0xff]
    %v1303 = vld [vmem:[%s10 + $0x38] sm:$0xff]
    %v1304 = vld [vmem:[%s10 + $0x40] sm:$0xff]
    %v1305 = vld [vmem:[%s10 + $0x48] sm:$0xff]
    %v1306 = vld [vmem:[%s10 + $0x50] sm:$0xff]
    %v1307 = vld [vmem:[%s10 + $0x58] sm:$0xff]
    %v1308 = vld [vmem:[%s10 + $0x60] sm:$0xff]
    %v1309 = vld [vmem:[%s10 + $0x68] sm:$0xff]
    %v1310 = vld [vmem:[%s10 + $0x70] sm:$0xff]
    %v1311 = vld [vmem:[%s10 + $0x78] sm:$0xff]
    %v1312 = vld [vmem:[%s10 + $0x80] sm:$0xff]
    %v1313 = vld [vmem:[%s10 + $0x88] sm:$0xff]
    %v1314 = vld [vmem:[%s10 + $0x90] sm:$0xff]
    %v1315 = vld [vmem:[%s10 + $0x98] sm:$0xff]
    %v1316 = vld [vmem:[%s10 + $0xa0] sm:$0xff]
    %v1317 = vld [vmem:[%s10 + $0xa8] sm:$0xff]
    %v1318 = vld [vmem:[%s10 + $0xb0] sm:$0xff]
    %v1319 = vld [vmem:[%s10 + $0xb8] sm:$0xff]
    %v1320 = vld [vmem:[%s10 + $0xc0] sm:$0xff]
    %v1321 = vld [vmem:[%s10 + $0xc8] sm:$0xff]
    %v1322 = vld [vmem:[%s10 + $0xd0] sm:$0xff]
    %v1323 = vld [vmem:[%s10 + $0xd8] sm:$0xff]
    %v1324 = vld [vmem:[%s10 + $0xe0] sm:$0xff]
    %v1325 = vld [vmem:[%s10 + $0xe8] sm:$0xff]
    %v1326 = vld [vmem:[%s10 + $0xf0] sm:$0xff]
    %v1327 = vld [vmem:[%s10 + $0xf8] sm:$0xff]
    %v1328 = vld [vmem:[%s11] sm:$0x1]
    %v1330 = vlaneseq
    %v1331 = vshrl.u32 %v1330, 7
    %v1332 = vsub.s32 0, %v1331
    %v1333 = vrot.slane %v1328, %v1332
    %1335 = vmatprep.subr.mxu0 0.0
    %1336 = vmatpush1.msra.mxu0 %v1311
    %1337 = vmatprep.subr.mxu0 0.0
    %1338 = vmatpush1.msra.mxu0 %v1310
    %1339 = vmatprep.subr.mxu0 0.0
    %1340 = vmatpush1.msra.mxu0 %v1309
    %1341 = vmatprep.subr.mxu0 0.0
    %1342 = vmatpush1.msra.mxu0 %v1308
    %1343 = vmatprep.subr.mxu0 0.0
    %1344 = vmatpush1.msra.mxu0 %v1307
    %1345 = vmatprep.subr.mxu0 0.0
    %1346 = vmatpush1.msra.mxu0 %v1306
    %1347 = vmatprep.subr.mxu0 0.0
    %1348 = vmatpush1.msra.mxu0 %v1305
    %1349 = vmatprep.subr.mxu0 0.0
    %1350 = vmatpush1.msra.mxu0 %v1304
    %1351 = vmatprep.subr.mxu0 0.0
    %1352 = vmatpush1.msra.mxu0 %v1303
    %1353 = vmatprep.subr.mxu0 0.0
    %1354 = vmatpush1.msra.mxu0 %v1302
    %1355 = vmatprep.subr.mxu0 0.0
    %1356 = vmatpush1.msra.mxu0 %v1301
    %1357 = vmatprep.subr.mxu0 0.0
    %1358 = vmatpush1.msra.mxu0 %v1300
    %1359 = vmatprep.subr.mxu0 0.0
    %1360 = vmatpush1.msra.mxu0 %v1299
    %1361 = vmatprep.subr.mxu0 0.0
    %1362 = vmatpush1.msra.mxu0 %v1298
    %1363 = vmatprep.subr.mxu0 0.0
    %1364 = vmatpush1.msra.mxu0 %v1297
    %1365 = vmatprep.subr.mxu0 0.0
    %1366 = vmatpush1.msra.mxu0 %v1296
    %1367 = vmatprep.subr.mxu0 0.0
    %1368 = vmatpush2.msra.mxu0 %v1327
    %1369 = vmatprep.subr.mxu0 0.0
    %1370 = vmatpush2.msra.mxu0 %v1326
    %1371 = vmatprep.subr.mxu0 0.0
    %1372 = vmatpush2.msra.mxu0 %v1325
    %1373 = vmatprep.subr.mxu0 0.0
    %1374 = vmatpush2.msra.mxu0 %v1324
    %1375 = vmatprep.subr.mxu0 0.0
    %1376 = vmatpush2.msra.mxu0 %v1323
    %1377 = vmatprep.subr.mxu0 0.0
    %1378 = vmatpush2.msra.mxu0 %v1322
    %1379 = vmatprep.subr.mxu0 0.0
    %1380 = vmatpush2.msra.mxu0 %v1321
    %1381 = vmatprep.subr.mxu0 0.0
    %1382 = vmatpush2.msra.mxu0 %v1320
    %1383 = vmatprep.subr.mxu0 0.0
    %1384 = vmatpush2.msra.mxu0 %v1319
    %1385 = vmatprep.subr.mxu0 0.0
    %1386 = vmatpush2.msra.mxu0 %v1318
    %1387 = vmatprep.subr.mxu0 0.0
    %1388 = vmatpush2.msra.mxu0 %v1317
    %1389 = vmatprep.subr.mxu0 0.0
    %1390 = vmatpush2.msra.mxu0 %v1316
    %1391 = vmatprep.subr.mxu0 0.0
    %1392 = vmatpush2.msra.mxu0 %v1315
    %1393 = vmatprep.subr.mxu0 0.0
    %1394 = vmatpush2.msra.mxu0 %v1314
    %1395 = vmatprep.subr.mxu0 0.0
    %1396 = vmatpush2.msra.mxu0 %v1313
    %1397 = vmatprep.subr.mxu0 0.0
    %1398 = vmatpush2.msra.mxu0 %v1312
    %1399 = vmatprep.mubr.f32.mxu0 %v1289
    %1400 = vmatmul.mubr.f32.gmra.mxu0 %v1288
    %v1401 = vpop.f32.mrf.mxu0
    %v1402 = vadd.f32 %v1333, %v1401
    %v1403 = vpop.f32.mrf.mxu0
    %1404 = vmatprep.mubr.f32.mxu0 %v1291
    %1405 = vmatmul.mubr.f32.gmra.mxu0 %v1290
    %v1406 = vpop.f32.mrf.mxu0
    %v1407 = vadd.f32 %v1333, %v1406
    %v1408 = vpop.f32.mrf.mxu0
    %1409 = vmatprep.mubr.f32.mxu0 %v1293
    %1410 = vmatmul.mubr.f32.gmra.mxu0 %v1292
    %v1411 = vpop.f32.mrf.mxu0
    %v1412 = vadd.f32 %v1333, %v1411
    %v1413 = vpop.f32.mrf.mxu0
    %1414 = vmatprep.mubr.f32.mxu0 %v1295
    %1415 = vmatmul.mubr.f32.gmra.mxu0 %v1294
    %v1416 = vpop.f32.mrf.mxu0
    %v1417 = vadd.f32 %v1333, %v1416
    %v1418 = vpop.f32.mrf.mxu0
    %1419 = vdwg.mxu0
    %v1420 = vadd.f32 %v947, %v1402
    %v1421 = vadd.f32 %v948, %v1407
    %v1422 = vadd.f32 %v949, %v1412
    %v1423 = vadd.f32 %v950, %v1417
    %v1424 = vld [vmem:[%s12] sm:$0x1]
    %v1425 = vld [vmem:[%s13] sm:$0x1]
    %v1426 = vsel %vm66, %v1420, 0.0
    %1427 = vadd.xlane.f32.xlu0 %v1426
    %v1428 = vpop.xlane.xlu0 %1427
    %v1429 = vsel %vm66, %v1421, 0.0
    %1430 = vadd.xlane.f32.xlu0 %v1429
    %v1431 = vpop.xlane.xlu0 %1430
    %v1432 = vsel %vm66, %v1422, 0.0
    %1433 = vadd.xlane.f32.xlu0 %v1432
    %v1434 = vpop.xlane.xlu0 %1433
    %v1435 = vsel %vm66, %v1423, 0.0
    %1436 = vadd.xlane.f32.xlu0 %v1435
    %v1437 = vpop.xlane.xlu0 %1436
    %v1438 = vmul.f32 %v1420, %v1420
    %v1439 = vmul.f32 %v1421, %v1421
    %v1440 = vmul.f32 %v1422, %v1422
    %v1441 = vmul.f32 %v1423, %v1423
    %v1442 = vsel %vm66, %v1438, 0.0
    %1443 = vadd.xlane.f32.xlu0 %v1442
    %v1444 = vpop.xlane.xlu0 %1443
    %v1445 = vsel %vm66, %v1439, 0.0
    %1446 = vadd.xlane.f32.xlu0 %v1445
    %v1447 = vpop.xlane.xlu0 %1446
    %v1448 = vsel %vm66, %v1440, 0.0
    %1449 = vadd.xlane.f32.xlu0 %v1448
    %v1450 = vpop.xlane.xlu0 %1449
    %v1451 = vsel %vm66, %v1441, 0.0
    %1452 = vadd.xlane.f32.xlu0 %v1451
    %v1453 = vpop.xlane.xlu0 %1452
    %v1454 = vmul.f32 %v1428, 0.015625
    %v1455 = vmul.f32 %v1431, 0.015625
    %v1456 = vmul.f32 %v1434, 0.015625
    %v1457 = vmul.f32 %v1437, 0.015625
    %v1458 = vmul.f32 %v1444, 0.015625
    %v1459 = vmul.f32 %v1447, 0.015625
    %v1460 = vmul.f32 %v1450, 0.015625
    %v1461 = vmul.f32 %v1453, 0.015625
    %v1462 = vmul.f32 %v1454, %v1454
    %v1463 = vmul.f32 %v1455, %v1455
    %v1464 = vmul.f32 %v1456, %v1456
    %v1465 = vmul.f32 %v1457, %v1457
    %v1466 = vsub.f32 %v1458, %v1462
    %v1467 = vsub.f32 %v1459, %v1463
    %v1468 = vsub.f32 %v1460, %v1464
    %v1469 = vsub.f32 %v1461, %v1465
    %v1470 = vsub.f32 %v1420, %v1454
    %v1471 = vsub.f32 %v1421, %v1455
    %v1472 = vsub.f32 %v1422, %v1456
    %v1473 = vsub.f32 %v1423, %v1457
    %v1474 = vadd.f32 %v1466, 1e-06
    %v1475 = vadd.f32 %v1467, 1e-06
    %v1476 = vadd.f32 %v1468, 1e-06
    %v1477 = vadd.f32 %v1469, 1e-06
    %v1478 = vrsqrt.pop %v1474
    %v1479 = vrsqrt.pop %v1475
    %v1480 = vrsqrt.pop %v1476
    %v1481 = vrsqrt.pop %v1477
    %v1482 = vmul.f32 %v1470, %v1478
    %v1483 = vmul.f32 %v1471, %v1479
    %v1484 = vmul.f32 %v1472, %v1480
    %v1485 = vmul.f32 %v1473, %v1481
    %v1487 = vlaneseq
    %v1488 = vshrl.u32 %v1487, 7
    %v1489 = vsub.s32 0, %v1488
    %v1490 = vrot.slane %v1424, %v1489
    %v1492 = vmul.f32 %v1482, %v1490
    %v1493 = vmul.f32 %v1483, %v1490
    %v1494 = vmul.f32 %v1484, %v1490
    %v1495 = vmul.f32 %v1485, %v1490
    %v1497 = vlaneseq
    %v1498 = vshrl.u32 %v1497, 7
    %v1499 = vsub.s32 0, %v1498
    %v1500 = vrot.slane %v1425, %v1499
    %v1502 = vadd.f32 %v1492, %v1500
    %v1503 = vadd.f32 %v1493, %v1500
    %v1504 = vadd.f32 %v1494, %v1500
    %v1505 = vadd.f32 %v1495, %v1500
    %1506 = vst.msk [vmem:[#allocation2] sm:$0xff] %vm66, %v1502
    %1507 = vst.msk [vmem:[#allocation2 + $0x8] sm:$0xff] %vm66, %v1503
    %1508 = vst.msk [vmem:[#allocation2 + $0x10] sm:$0xff] %vm66, %v1504
    %1509 = vst.msk [vmem:[#allocation2 + $0x18] sm:$0xff] %vm66, %v1505
    // Predicated region
    $region66: #{block_forward.1} parent=1 // pred_check
      _
    $region67: #{block_forward.1} parent=1 // pred_check_branch
      %1511 = sbr.rel (0) target = $region69
    $region68: #{block_forward.1} parent=1 // pred_region
      %s1513 = ssub.s32 512, 512
      %1514 = vsyncadd [#allocation3], %s1513
      %s1515 = sshll.u32 [#allocation2], 4
      %s1516 = int_to_ptr.vmem [resolvable:$true] %s1515
      %1521 = dma.vmem_to_hbm [thread:$0]  %s1516, 512, %s16, [#allocation3], 128, 128, 8
    $region69: #{block_forward.1} parent=1 // pred_fallthru
      _
    // Predicated region
    $region70: #{block_forward.1} parent=1 // pred_check
      _
    $region71: #{block_forward.1} parent=1 // pred_check_branch
      %1523 = sbr.rel (0) target = $region73
    $region72: #{block_forward.1} parent=1 // pred_region
      %1524 = dma.done [#allocation3], 512
    $region73: #{block_forward.1} parent=1 // pred_fallthru
      _
    %1525 = vsyncpa [#allocation3], 1

</llo_original>
